<compile_context>
chip_gen: v7x
topology: tpu7x:2x2x1
jax: 0.10.0
libtpu: 0.0.40
codegen_flags: <defaults>
</compile_context>

<pallas_src>
import math
import functools

import jax
import jax.numpy as jnp
from jax.experimental import pallas as pl
from jax.experimental.pallas import tpu as pltpu

D_MODEL = 256
HEADS = 4
NEG_INF = -1e30  # finite "minus infinity": exp() underflows to 0, never NaN


def _mha_kernel(q_ref, k_ref, v_ref, bias_ref, w_ref, b_ref, out_ref, *, heads):
    """Multi-head attention for a block of Bt batch elements (all in VMEM).

    q_ref    : (Bt, S_q,  D)     bf16
    k_ref    : (Bt, S_kv, D)     bf16
    v_ref    : (Bt, S_kv, D)     bf16
    bias_ref : (Bt, S_q, S_kv)   bf16  additive mask bias (0 = keep, -1e30 = drop)
    w_ref    : (4, D, D)         bf16  stacked [Wq, Wk, Wv, Wo], (in, out) layout
    b_ref    : (4, D)            f32   stacked [bq, bk, bv, bo]
    out_ref  : (Bt, S_q,  D)     f32
    """
    Bt, Sq, D = q_ref.shape
    Skv = k_ref.shape[1]
    dk = D // heads
    scale = 1.0 / math.sqrt(dk)

    # ---- Row-packed projections: Bt*S rows per matmul (bf16 operands, f32 accumulate).
    q2 = q_ref[...].reshape(Bt * Sq, D)
    k2 = k_ref[...].reshape(Bt * Skv, D)
    v2 = v_ref[...].reshape(Bt * Skv, D)

    # 1/sqrt(dk) folded into the (biased) query projection: one mul over (rows, D)
    # instead of a mul over every (q, k) score.
    qp = ((jnp.dot(q2, w_ref[0], preferred_element_type=jnp.float32)
           + b_ref[0:1, :]) * scale).astype(jnp.bfloat16)
    kp = (jnp.dot(k2, w_ref[1], preferred_element_type=jnp.float32)
          + b_ref[1:2, :]).astype(jnp.bfloat16)
    vp = (jnp.dot(v2, w_ref[2], preferred_element_type=jnp.float32)
          + b_ref[2:3, :]).astype(jnp.bfloat16)

    # Additive mask bias, shared by every head of a batch element (broadcast, no copy).
    bias = bias_ref[...].astype(jnp.float32)                      # (Bt, Sq, Skv)

    # ---- Per-head attention (heads=4, statically unrolled).  Each head is a pair of
    # leading-batch rank-3 einsums; no axis-0 concatenates, no heads-x bias duplication.
    # TODO(synk): for large S_kv, tile the key axis with an online softmax so the
    # (Bt, Sq, Skv) score/probability tensors stay bounded on v7x's 64 MiB VMEM.
    head_ctx = []
    for h in range(heads):
        qh = qp[:, h * dk:(h + 1) * dk].reshape(Bt, Sq, dk)
        kh = kp[:, h * dk:(h + 1) * dk].reshape(Bt, Skv, dk)
        vh = vp[:, h * dk:(h + 1) * dk].reshape(Bt, Skv, dk)

        s = jnp.einsum('bqd,bkd->bqk', qh, kh,
                       preferred_element_type=jnp.float32) + bias  # (Bt, Sq, Skv)
        m = jnp.max(s, axis=-1, keepdims=True)
        e = jnp.exp(s - m)
        p = e * pl.reciprocal(jnp.sum(e, axis=-1, keepdims=True), approx=False)

        o_h = jnp.einsum('bqk,bkd->bqd', p.astype(jnp.bfloat16), vh,
                         preferred_element_type=jnp.float32)        # (Bt, Sq, dk)
        head_ctx.append(o_h.reshape(Bt * Sq, dk).astype(jnp.bfloat16))

    # ---- Re-merge heads along the feature (lane) axis, then one full K=256 W_o matmul.
    ctx = jnp.concatenate(head_ctx, axis=-1)                        # (Bt*Sq, D) bf16
    out = (jnp.dot(ctx, w_ref[3], preferred_element_type=jnp.float32) + b_ref[3:4, :])
    out_ref[...] = out.reshape(Bt, Sq, D).astype(out_ref.dtype)


def _vmem_block_bytes(bt, s_q, s_kv, d, heads):
    """Rough per-grid-step VMEM footprint (double-buffered I/O blocks + weights +
    live intermediates) used to keep Bt inside the chip's VMEM budget."""
    dk = d // heads
    rq, rkv = bt * s_q, bt * s_kv
    io = 2 * ((rq * d + 2 * rkv * d + bt * s_q * s_kv) * 2 + rq * d * 4)  # bf16 in, f32 out
    weights = 2 * (4 * d * d * 2) + 4 * d * 4
    proj = (rq + 2 * rkv) * d * (4 + 2)               # f32 matmul results + bf16 copies
    attn = 3 * bt * s_q * s_kv * 4 + heads * rq * dk * 2  # s/e/p (one head live) + head outs
    outp = rq * d * (2 + 4)                           # ctx bf16 + out f32
    return io + weights + proj + attn + outp


def _vmem_budget_bytes():
    """Half of the chip's VMEM capacity (fallback: 64 MiB total -> 32 MiB budget,
    which is safe on v5e/v6e/v7x)."""
    cap = 64 * 1024 * 1024
    try:
        info = pltpu.get_tpu_info()
        cap = int(getattr(info, "vmem_capacity_bytes", cap) or cap)
    except Exception:
        pass
    return cap // 2


def _choose_block_batch(batch, s_q, s_kv, d, heads, vmem_budget,
                        target_rows=256, max_rows=1024):
    """Pick Bt (batch elements per grid step):
      - divisor of `batch`, Bt*S_q <= max_rows, and fits the VMEM byte budget;
      - keep >= 2 grid steps whenever batch >= 2 (so both v7x TensorCores get work);
      - smallest Bt that reaches target_rows (256 rows fills the v6e/v7x MXU; v5e
        saturates at 128 already), else the largest feasible Bt."""
    divisors = [x for x in range(1, batch + 1) if batch % x == 0]
    feasible = [x for x in divisors
                if x * s_q <= max_rows
                and _vmem_block_bytes(x, s_q, s_kv, d, heads) <= vmem_budget]
    if not feasible:
        feasible = [1]
    multi_step = [x for x in feasible if batch // x >= 2]
    pool = multi_step if multi_step else feasible
    for x in pool:
        if x * s_q >= target_rows:
            return x
    return pool[-1]


def multi_head_attention(q, k, v, mask, params, heads=HEADS):
    B, S_q, D = q.shape
    S_kv = k.shape[1]
    assert D % heads == 0

    # Additive bias mask precomputed once in the wrapper (0 = keep, -1e30 = drop).
    # TODO(synk): for pure padding masks, per-row valid lengths via scalar prefetch would
    # remove this (B, Sq, Skv) stream entirely; kept dense to support arbitrary masks.
    if mask is None:
        bias = jnp.zeros((B, S_q, S_kv), jnp.bfloat16)
    else:
        bias = jnp.where(mask != 0, 0.0, NEG_INF)
        bias = jnp.broadcast_to(bias, (B, S_q, S_kv)).astype(jnp.bfloat16)

    # bf16 activations + weights: halves DMA / vld traffic, feeds the MXU at bf16 rate
    # (accumulation stays f32 inside the kernel).
    q_bf = q.astype(jnp.bfloat16)
    k_bf = k.astype(jnp.bfloat16)
    v_bf = v.astype(jnp.bfloat16)
    w_bf16 = params["w"].astype(jnp.bfloat16)
    b_f32 = params["b"].astype(jnp.float32)

    vmem_budget = _vmem_budget_bytes()
    Bt = _choose_block_batch(B, S_q, S_kv, D, heads, vmem_budget)

    batch_map = lambda i: (i, 0, 0)
    const3 = lambda i: (0, 0, 0)
    const2 = lambda i: (0, 0)

    return pl.pallas_call(
        functools.partial(_mha_kernel, heads=heads),
        out_shape=jax.ShapeDtypeStruct((B, S_q, D), jnp.float32),
        grid=(B // Bt,),
        in_specs=[
            pl.BlockSpec((Bt, S_q, D), batch_map),        # q  (bf16)
            pl.BlockSpec((Bt, S_kv, D), batch_map),       # k  (bf16)
            pl.BlockSpec((Bt, S_kv, D), batch_map),       # v  (bf16)
            pl.BlockSpec((Bt, S_q, S_kv), batch_map),     # additive mask bias (bf16)
            pl.BlockSpec((4, D, D), const3),              # stacked Wq,Wk,Wv,Wo (bf16)
            pl.BlockSpec((4, D), const2),                 # stacked biases (f32)
        ],
        out_specs=pl.BlockSpec((Bt, S_q, D), batch_map),
        compiler_params=pltpu.CompilerParams(
            dimension_semantics=("parallel",),
            vmem_limit_bytes=int(vmem_budget),
        ),
    )(q_bf, k_bf, v_bf, bias, w_bf16, b_f32)


def multi_head_attention_ref(q, k, v, mask, params, heads=HEADS):
    """Pure-JAX f32 reference matching the PyTorch forward (with -1e30 instead of -inf)."""
    B, S_q, D = q.shape
    dk = D // heads
    w, b = params["w"], params["b"]
    qp, kp, vp = q @ w[0] + b[0], k @ w[1] + b[1], v @ w[2] + b[2]

    def split(x):
        return x.reshape(B, x.shape[1], heads, dk).transpose(0, 2, 1, 3)

    qh, kh, vh = split(qp), split(kp), split(vp)
    s = jnp.einsum('bhqd,bhkd->bhqk', qh, kh) / math.sqrt(dk)
    if mask is not None:
        s = jnp.where(mask[:, None, :, :] != 0, s, NEG_INF)
    p = jax.nn.softmax(s, axis=-1)
    o = jnp.einsum('bhqk,bhkd->bhqd', p, vh)
    o = o.transpose(0, 2, 1, 3).reshape(B, S_q, D)
    return o @ w[3] + b[3]


if __name__ == "__main__":
    B, S_Q, S_KV = 2, 8, 16

    key = jax.random.PRNGKey(0)
    kq, kk, kv, kw, kb = jax.random.split(key, 5)

    q = jax.random.normal(kq, (B, S_Q, D_MODEL), jnp.float32)
    k = jax.random.normal(kk, (B, S_KV, D_MODEL), jnp.float32)
    v = jax.random.normal(kv, (B, S_KV, D_MODEL), jnp.float32)

    # Padding-style mask (nonzero = keep), same shape the PyTorch forward broadcasts
    # over heads via mask.unsqueeze(1). No fully-masked rows.
    mask = jnp.ones((B, S_Q, S_KV), jnp.float32)
    mask = mask.at[1, :, -4:].set(0.0)
    mask = mask.at[0, :, -1:].set(0.0)

    params = {
        "w": jax.random.normal(kw, (4, D_MODEL, D_MODEL), jnp.float32) * 0.05,  # (in, out)
        "b": jax.random.normal(kb, (4, D_MODEL), jnp.float32) * 0.05,
    }

    out = multi_head_attention(q, k, v, mask, params, heads=HEADS)
    out = jax.block_until_ready(out)

    ref = multi_head_attention_ref(q, k, v, mask, params, heads=HEADS)

    assert out.shape == (B, S_Q, D_MODEL)
    assert bool(jnp.all(jnp.isfinite(out)))
    # Loose tolerance: kernel uses bf16 MXU operands (f32 accumulate).
    assert float(jnp.max(jnp.abs(out - ref))) < 0.25
    print("KERNEL_OK")
</pallas_src>

<mosaic_0001>
module attributes {stable_mosaic.version = 11 : i64} {
  func.func @_mha_kernel(%arg0: i32, %arg1: memref<1x8x256xbf16, #tpu.memory_space<vmem>>, %arg2: memref<1x16x256xbf16, #tpu.memory_space<vmem>>, %arg3: memref<1x16x256xbf16, #tpu.memory_space<vmem>>, %arg4: memref<1x8x16xbf16, #tpu.memory_space<vmem>>, %arg5: memref<4x256x256xbf16, #tpu.memory_space<vmem>>, %arg6: memref<4x256xf32, #tpu.memory_space<vmem>>, %arg7: memref<1x8x256xf32, #tpu.memory_space<vmem>>) attributes {dimension_semantics = [#tpu.dimension_semantics<parallel>], iteration_bounds = array<i64: 2>, scalar_prefetch = 0 : i64, scratch_operands = 0 : i64, tpu.core_type = #tpu.core_type<tc>, window_params = [{transform_indices = @transform_0, window_bounds = array<i64: 1, 8, 256>}, {transform_indices = @transform_1, window_bounds = array<i64: 1, 16, 256>}, {transform_indices = @transform_2, window_bounds = array<i64: 1, 16, 256>}, {transform_indices = @transform_3, window_bounds = array<i64: 1, 8, 16>}, {pipeline_mode = #tpu.pipeline_mode<synchronous>, transform_indices = @transform_4, window_bounds = array<i64: 4, 256, 256>}, {pipeline_mode = #tpu.pipeline_mode<synchronous>, transform_indices = @transform_5, window_bounds = array<i64: 4, 256>}, {transform_indices = @transform_6, window_bounds = array<i64: 1, 8, 256>}]} {
    %c0 = arith.constant 0 : index
    %c0_0 = arith.constant 0 : index
    %c0_1 = arith.constant 0 : index
    %0 = vector.load %arg1[%c0, %c0_0, %c0_1] : memref<1x8x256xbf16, #tpu.memory_space<vmem>>, vector<1x8x256xbf16>
    %1 = vector.shape_cast %0 : vector<1x8x256xbf16> to vector<8x256xbf16>
    %c0_2 = arith.constant 0 : index
    %c0_3 = arith.constant 0 : index
    %c0_4 = arith.constant 0 : index
    %2 = vector.load %arg2[%c0_2, %c0_3, %c0_4] : memref<1x16x256xbf16, #tpu.memory_space<vmem>>, vector<1x16x256xbf16>
    %3 = vector.shape_cast %2 : vector<1x16x256xbf16> to vector<16x256xbf16>
    %c0_5 = arith.constant 0 : index
    %c0_6 = arith.constant 0 : index
    %c0_7 = arith.constant 0 : index
    %4 = vector.load %arg3[%c0_5, %c0_6, %c0_7] : memref<1x16x256xbf16, #tpu.memory_space<vmem>>, vector<1x16x256xbf16>
    %5 = vector.shape_cast %4 : vector<1x16x256xbf16> to vector<16x256xbf16>
    %c0_8 = arith.constant 0 : index
    %c0_9 = arith.constant 0 : index
    %c0_10 = arith.constant 0 : index
    %6 = vector.load %arg5[%c0_8, %c0_9, %c0_10] : memref<4x256x256xbf16, #tpu.memory_space<vmem>>, vector<1x256x256xbf16>
    %7 = vector.shape_cast %6 : vector<1x256x256xbf16> to vector<256x256xbf16>
    %cst = arith.constant dense<0.000000e+00> : vector<8x256xf32>
    %8 = tpu.matmul %1, %7, %cst {dimension_numbers = #tpu.dot_dimension_numbers<[1], [0], [0], [1], [0, 0, 1, 1], [], []>} : vector<8x256xbf16>, vector<256x256xbf16>, vector<8x256xf32> -> vector<8x256xf32>
    %c0_11 = arith.constant 0 : index
    %c0_12 = arith.constant 0 : index
    %9 = vector.load %arg6[%c0_11, %c0_12] : memref<4x256xf32, #tpu.memory_space<vmem>>, vector<1x256xf32>
    %10 = vector.broadcast %9 : vector<1x256xf32> to vector<8x256xf32>
    %11 = arith.addf %8, %10 : vector<8x256xf32>
    %cst_13 = arith.constant 1.250000e-01 : f32
    %12 = vector.broadcast %cst_13 : f32 to vector<8x256xf32>
    %13 = arith.mulf %11, %12 : vector<8x256xf32>
    %14 = arith.truncf %13 : vector<8x256xf32> to vector<8x256xbf16>
    %c1 = arith.constant 1 : index
    %c0_14 = arith.constant 0 : index
    %c0_15 = arith.constant 0 : index
    %15 = vector.load %arg5[%c1, %c0_14, %c0_15] : memref<4x256x256xbf16, #tpu.memory_space<vmem>>, vector<1x256x256xbf16>
    %16 = vector.shape_cast %15 : vector<1x256x256xbf16> to vector<256x256xbf16>
    %cst_16 = arith.constant dense<0.000000e+00> : vector<16x256xf32>
    %17 = tpu.matmul %3, %16, %cst_16 {dimension_numbers = #tpu.dot_dimension_numbers<[1], [0], [0], [1], [0, 0, 1, 1], [], []>} : vector<16x256xbf16>, vector<256x256xbf16>, vector<16x256xf32> -> vector<16x256xf32>
    %c1_17 = arith.constant 1 : index
    %c0_18 = arith.constant 0 : index
    %18 = vector.load %arg6[%c1_17, %c0_18] : memref<4x256xf32, #tpu.memory_space<vmem>>, vector<1x256xf32>
    %19 = vector.broadcast %18 : vector<1x256xf32> to vector<16x256xf32>
    %20 = arith.addf %17, %19 : vector<16x256xf32>
    %21 = arith.truncf %20 : vector<16x256xf32> to vector<16x256xbf16>
    %c2 = arith.constant 2 : index
    %c0_19 = arith.constant 0 : index
    %c0_20 = arith.constant 0 : index
    %22 = vector.load %arg5[%c2, %c0_19, %c0_20] : memref<4x256x256xbf16, #tpu.memory_space<vmem>>, vector<1x256x256xbf16>
    %23 = vector.shape_cast %22 : vector<1x256x256xbf16> to vector<256x256xbf16>
    %cst_21 = arith.constant dense<0.000000e+00> : vector<16x256xf32>
    %24 = tpu.matmul %5, %23, %cst_21 {dimension_numbers = #tpu.dot_dimension_numbers<[1], [0], [0], [1], [0, 0, 1, 1], [], []>} : vector<16x256xbf16>, vector<256x256xbf16>, vector<16x256xf32> -> vector<16x256xf32>
    %c2_22 = arith.constant 2 : index
    %c0_23 = arith.constant 0 : index
    %25 = vector.load %arg6[%c2_22, %c0_23] : memref<4x256xf32, #tpu.memory_space<vmem>>, vector<1x256xf32>
    %26 = vector.broadcast %25 : vector<1x256xf32> to vector<16x256xf32>
    %27 = arith.addf %24, %26 : vector<16x256xf32>
    %28 = arith.truncf %27 : vector<16x256xf32> to vector<16x256xbf16>
    %c0_24 = arith.constant 0 : index
    %c0_25 = arith.constant 0 : index
    %c0_26 = arith.constant 0 : index
    %29 = vector.load %arg4[%c0_24, %c0_25, %c0_26] : memref<1x8x16xbf16, #tpu.memory_space<vmem>>, vector<1x8x16xbf16>
    %30 = arith.extf %29 : vector<1x8x16xbf16> to vector<1x8x16xf32>
    %31 = vector.extract_strided_slice %14 {offsets = [0, 0], sizes = [8, 64], strides = [1, 1]} : vector<8x256xbf16> to vector<8x64xbf16>
    %32 = vector.shape_cast %31 : vector<8x64xbf16> to vector<1x8x64xbf16>
    %33 = vector.extract_strided_slice %21 {offsets = [0, 0], sizes = [16, 64], strides = [1, 1]} : vector<16x256xbf16> to vector<16x64xbf16>
    %34 = vector.shape_cast %33 : vector<16x64xbf16> to vector<1x16x64xbf16>
    %35 = vector.extract_strided_slice %28 {offsets = [0, 0], sizes = [16, 64], strides = [1, 1]} : vector<16x256xbf16> to vector<16x64xbf16>
    %36 = vector.shape_cast %35 : vector<16x64xbf16> to vector<1x16x64xbf16>
    "tpu.trace_start"() <{level = 10 : i32, message = "bqd,bkd->bqk"}> : () -> ()
    %cst_27 = arith.constant dense<0.000000e+00> : vector<1x8x16xf32>
    %37 = tpu.matmul %32, %34, %cst_27 {dimension_numbers = #tpu.dot_dimension_numbers<[2], [2], [1], [1], [0, 0, 0, 1, 1, 1], [0], [0]>} : vector<1x8x64xbf16>, vector<1x16x64xbf16>, vector<1x8x16xf32> -> vector<1x8x16xf32>
    "tpu.trace_stop"() : () -> ()
    %38 = arith.addf %37, %30 : vector<1x8x16xf32>
    %cst_28 = arith.constant dense<0xFF800000> : vector<1x8xf32>
    %39 = vector.multi_reduction <maximumf>, %38, %cst_28 [2] : vector<1x8x16xf32> to vector<1x8xf32>
    %40 = vector.shape_cast %39 : vector<1x8xf32> to vector<1x8x1xf32>
    %41 = vector.broadcast %40 : vector<1x8x1xf32> to vector<1x8x16xf32>
    %42 = arith.subf %38, %41 : vector<1x8x16xf32>
    %43 = math.exp %42 : vector<1x8x16xf32>
    %cst_29 = arith.constant dense<0.000000e+00> : vector<1x8xf32>
    %44 = vector.multi_reduction <add>, %43, %cst_29 [2] : vector<1x8x16xf32> to vector<1x8xf32>
    %45 = vector.shape_cast %44 : vector<1x8xf32> to vector<1x8x1xf32>
    %46 = tpu.reciprocal %45 : vector<1x8x1xf32> -> vector<1x8x1xf32>
    %47 = vector.broadcast %46 : vector<1x8x1xf32> to vector<1x8x16xf32>
    %48 = arith.mulf %43, %47 : vector<1x8x16xf32>
    %49 = arith.truncf %48 : vector<1x8x16xf32> to vector<1x8x16xbf16>
    "tpu.trace_start"() <{level = 10 : i32, message = "bqk,bkd->bqd"}> : () -> ()
    %cst_30 = arith.constant dense<0.000000e+00> : vector<1x8x64xf32>
    %50 = tpu.matmul %49, %36, %cst_30 {dimension_numbers = #tpu.dot_dimension_numbers<[2], [1], [1], [2], [0, 0, 0, 1, 1, 2], [0], [0]>} : vector<1x8x16xbf16>, vector<1x16x64xbf16>, vector<1x8x64xf32> -> vector<1x8x64xf32>
    "tpu.trace_stop"() : () -> ()
    %51 = vector.shape_cast %50 : vector<1x8x64xf32> to vector<8x64xf32>
    %52 = arith.truncf %51 : vector<8x64xf32> to vector<8x64xbf16>
    %53 = vector.extract_strided_slice %14 {offsets = [0, 64], sizes = [8, 64], strides = [1, 1]} : vector<8x256xbf16> to vector<8x64xbf16>
    %54 = vector.shape_cast %53 : vector<8x64xbf16> to vector<1x8x64xbf16>
    %55 = vector.extract_strided_slice %21 {offsets = [0, 64], sizes = [16, 64], strides = [1, 1]} : vector<16x256xbf16> to vector<16x64xbf16>
    %56 = vector.shape_cast %55 : vector<16x64xbf16> to vector<1x16x64xbf16>
    %57 = vector.extract_strided_slice %28 {offsets = [0, 64], sizes = [16, 64], strides = [1, 1]} : vector<16x256xbf16> to vector<16x64xbf16>
    %58 = vector.shape_cast %57 : vector<16x64xbf16> to vector<1x16x64xbf16>
    "tpu.trace_start"() <{level = 10 : i32, message = "bqd,bkd->bqk"}> : () -> ()
    %cst_31 = arith.constant dense<0.000000e+00> : vector<1x8x16xf32>
    %59 = tpu.matmul %54, %56, %cst_31 {dimension_numbers = #tpu.dot_dimension_numbers<[2], [2], [1], [1], [0, 0, 0, 1, 1, 1], [0], [0]>} : vector<1x8x64xbf16>, vector<1x16x64xbf16>, vector<1x8x16xf32> -> vector<1x8x16xf32>
    "tpu.trace_stop"() : () -> ()
    %60 = arith.addf %59, %30 : vector<1x8x16xf32>
    %cst_32 = arith.constant dense<0xFF800000> : vector<1x8xf32>
    %61 = vector.multi_reduction <maximumf>, %60, %cst_32 [2] : vector<1x8x16xf32> to vector<1x8xf32>
    %62 = vector.shape_cast %61 : vector<1x8xf32> to vector<1x8x1xf32>
    %63 = vector.broadcast %62 : vector<1x8x1xf32> to vector<1x8x16xf32>
    %64 = arith.subf %60, %63 : vector<1x8x16xf32>
    %65 = math.exp %64 : vector<1x8x16xf32>
    %cst_33 = arith.constant dense<0.000000e+00> : vector<1x8xf32>
    %66 = vector.multi_reduction <add>, %65, %cst_33 [2] : vector<1x8x16xf32> to vector<1x8xf32>
    %67 = vector.shape_cast %66 : vector<1x8xf32> to vector<1x8x1xf32>
    %68 = tpu.reciprocal %67 : vector<1x8x1xf32> -> vector<1x8x1xf32>
    %69 = vector.broadcast %68 : vector<1x8x1xf32> to vector<1x8x16xf32>
    %70 = arith.mulf %65, %69 : vector<1x8x16xf32>
    %71 = arith.truncf %70 : vector<1x8x16xf32> to vector<1x8x16xbf16>
    "tpu.trace_start"() <{level = 10 : i32, message = "bqk,bkd->bqd"}> : () -> ()
    %cst_34 = arith.constant dense<0.000000e+00> : vector<1x8x64xf32>
    %72 = tpu.matmul %71, %58, %cst_34 {dimension_numbers = #tpu.dot_dimension_numbers<[2], [1], [1], [2], [0, 0, 0, 1, 1, 2], [0], [0]>} : vector<1x8x16xbf16>, vector<1x16x64xbf16>, vector<1x8x64xf32> -> vector<1x8x64xf32>
    "tpu.trace_stop"() : () -> ()
    %73 = vector.shape_cast %72 : vector<1x8x64xf32> to vector<8x64xf32>
    %74 = arith.truncf %73 : vector<8x64xf32> to vector<8x64xbf16>
    %75 = vector.extract_strided_slice %14 {offsets = [0, 128], sizes = [8, 64], strides = [1, 1]} : vector<8x256xbf16> to vector<8x64xbf16>
    %76 = vector.shape_cast %75 : vector<8x64xbf16> to vector<1x8x64xbf16>
    %77 = vector.extract_strided_slice %21 {offsets = [0, 128], sizes = [16, 64], strides = [1, 1]} : vector<16x256xbf16> to vector<16x64xbf16>
    %78 = vector.shape_cast %77 : vector<16x64xbf16> to vector<1x16x64xbf16>
    %79 = vector.extract_strided_slice %28 {offsets = [0, 128], sizes = [16, 64], strides = [1, 1]} : vector<16x256xbf16> to vector<16x64xbf16>
    %80 = vector.shape_cast %79 : vector<16x64xbf16> to vector<1x16x64xbf16>
    "tpu.trace_start"() <{level = 10 : i32, message = "bqd,bkd->bqk"}> : () -> ()
    %cst_35 = arith.constant dense<0.000000e+00> : vector<1x8x16xf32>
    %81 = tpu.matmul %76, %78, %cst_35 {dimension_numbers = #tpu.dot_dimension_numbers<[2], [2], [1], [1], [0, 0, 0, 1, 1, 1], [0], [0]>} : vector<1x8x64xbf16>, vector<1x16x64xbf16>, vector<1x8x16xf32> -> vector<1x8x16xf32>
    "tpu.trace_stop"() : () -> ()
    %82 = arith.addf %81, %30 : vector<1x8x16xf32>
    %cst_36 = arith.constant dense<0xFF800000> : vector<1x8xf32>
    %83 = vector.multi_reduction <maximumf>, %82, %cst_36 [2] : vector<1x8x16xf32> to vector<1x8xf32>
    %84 = vector.shape_cast %83 : vector<1x8xf32> to vector<1x8x1xf32>
    %85 = vector.broadcast %84 : vector<1x8x1xf32> to vector<1x8x16xf32>
    %86 = arith.subf %82, %85 : vector<1x8x16xf32>
    %87 = math.exp %86 : vector<1x8x16xf32>
    %cst_37 = arith.constant dense<0.000000e+00> : vector<1x8xf32>
    %88 = vector.multi_reduction <add>, %87, %cst_37 [2] : vector<1x8x16xf32> to vector<1x8xf32>
    %89 = vector.shape_cast %88 : vector<1x8xf32> to vector<1x8x1xf32>
    %90 = tpu.reciprocal %89 : vector<1x8x1xf32> -> vector<1x8x1xf32>
    %91 = vector.broadcast %90 : vector<1x8x1xf32> to vector<1x8x16xf32>
    %92 = arith.mulf %87, %91 : vector<1x8x16xf32>
    %93 = arith.truncf %92 : vector<1x8x16xf32> to vector<1x8x16xbf16>
    "tpu.trace_start"() <{level = 10 : i32, message = "bqk,bkd->bqd"}> : () -> ()
    %cst_38 = arith.constant dense<0.000000e+00> : vector<1x8x64xf32>
    %94 = tpu.matmul %93, %80, %cst_38 {dimension_numbers = #tpu.dot_dimension_numbers<[2], [1], [1], [2], [0, 0, 0, 1, 1, 2], [0], [0]>} : vector<1x8x16xbf16>, vector<1x16x64xbf16>, vector<1x8x64xf32> -> vector<1x8x64xf32>
    "tpu.trace_stop"() : () -> ()
    %95 = vector.shape_cast %94 : vector<1x8x64xf32> to vector<8x64xf32>
    %96 = arith.truncf %95 : vector<8x64xf32> to vector<8x64xbf16>
    %97 = vector.extract_strided_slice %14 {offsets = [0, 192], sizes = [8, 64], strides = [1, 1]} : vector<8x256xbf16> to vector<8x64xbf16>
    %98 = vector.shape_cast %97 : vector<8x64xbf16> to vector<1x8x64xbf16>
    %99 = vector.extract_strided_slice %21 {offsets = [0, 192], sizes = [16, 64], strides = [1, 1]} : vector<16x256xbf16> to vector<16x64xbf16>
    %100 = vector.shape_cast %99 : vector<16x64xbf16> to vector<1x16x64xbf16>
    %101 = vector.extract_strided_slice %28 {offsets = [0, 192], sizes = [16, 64], strides = [1, 1]} : vector<16x256xbf16> to vector<16x64xbf16>
    %102 = vector.shape_cast %101 : vector<16x64xbf16> to vector<1x16x64xbf16>
    "tpu.trace_start"() <{level = 10 : i32, message = "bqd,bkd->bqk"}> : () -> ()
    %cst_39 = arith.constant dense<0.000000e+00> : vector<1x8x16xf32>
    %103 = tpu.matmul %98, %100, %cst_39 {dimension_numbers = #tpu.dot_dimension_numbers<[2], [2], [1], [1], [0, 0, 0, 1, 1, 1], [0], [0]>} : vector<1x8x64xbf16>, vector<1x16x64xbf16>, vector<1x8x16xf32> -> vector<1x8x16xf32>
    "tpu.trace_stop"() : () -> ()
    %104 = arith.addf %103, %30 : vector<1x8x16xf32>
    %cst_40 = arith.constant dense<0xFF800000> : vector<1x8xf32>
    %105 = vector.multi_reduction <maximumf>, %104, %cst_40 [2] : vector<1x8x16xf32> to vector<1x8xf32>
    %106 = vector.shape_cast %105 : vector<1x8xf32> to vector<1x8x1xf32>
    %107 = vector.broadcast %106 : vector<1x8x1xf32> to vector<1x8x16xf32>
    %108 = arith.subf %104, %107 : vector<1x8x16xf32>
    %109 = math.exp %108 : vector<1x8x16xf32>
    %cst_41 = arith.constant dense<0.000000e+00> : vector<1x8xf32>
    %110 = vector.multi_reduction <add>, %109, %cst_41 [2] : vector<1x8x16xf32> to vector<1x8xf32>
    %111 = vector.shape_cast %110 : vector<1x8xf32> to vector<1x8x1xf32>
    %112 = tpu.reciprocal %111 : vector<1x8x1xf32> -> vector<1x8x1xf32>
    %113 = vector.broadcast %112 : vector<1x8x1xf32> to vector<1x8x16xf32>
    %114 = arith.mulf %109, %113 : vector<1x8x16xf32>
    %115 = arith.truncf %114 : vector<1x8x16xf32> to vector<1x8x16xbf16>
    "tpu.trace_start"() <{level = 10 : i32, message = "bqk,bkd->bqd"}> : () -> ()
    %cst_42 = arith.constant dense<0.000000e+00> : vector<1x8x64xf32>
    %116 = tpu.matmul %115, %102, %cst_42 {dimension_numbers = #tpu.dot_dimension_numbers<[2], [1], [1], [2], [0, 0, 0, 1, 1, 2], [0], [0]>} : vector<1x8x16xbf16>, vector<1x16x64xbf16>, vector<1x8x64xf32> -> vector<1x8x64xf32>
    "tpu.trace_stop"() : () -> ()
    %117 = vector.shape_cast %116 : vector<1x8x64xf32> to vector<8x64xf32>
    %118 = arith.truncf %117 : vector<8x64xf32> to vector<8x64xbf16>
    %119 = tpu.concatenate %52, %74, %96, %118 in 1 : vector<8x64xbf16>, vector<8x64xbf16>, vector<8x64xbf16>, vector<8x64xbf16> -> vector<8x256xbf16>
    %c3 = arith.constant 3 : index
    %c0_43 = arith.constant 0 : index
    %c0_44 = arith.constant 0 : index
    %120 = vector.load %arg5[%c3, %c0_43, %c0_44] : memref<4x256x256xbf16, #tpu.memory_space<vmem>>, vector<1x256x256xbf16>
    %121 = vector.shape_cast %120 : vector<1x256x256xbf16> to vector<256x256xbf16>
    %cst_45 = arith.constant dense<0.000000e+00> : vector<8x256xf32>
    %122 = tpu.matmul %119, %121, %cst_45 {dimension_numbers = #tpu.dot_dimension_numbers<[1], [0], [0], [1], [0, 0, 1, 1], [], []>} : vector<8x256xbf16>, vector<256x256xbf16>, vector<8x256xf32> -> vector<8x256xf32>
    %c3_46 = arith.constant 3 : index
    %c0_47 = arith.constant 0 : index
    %123 = vector.load %arg6[%c3_46, %c0_47] : memref<4x256xf32, #tpu.memory_space<vmem>>, vector<1x256xf32>
    %124 = vector.broadcast %123 : vector<1x256xf32> to vector<8x256xf32>
    %125 = arith.addf %122, %124 : vector<8x256xf32>
    %126 = vector.shape_cast %125 : vector<8x256xf32> to vector<1x8x256xf32>
    %c0_48 = arith.constant 0 : index
    %c0_49 = arith.constant 0 : index
    %c0_50 = arith.constant 0 : index
    %127 = vector.load %arg7[%c0_48, %c0_49, %c0_50] : memref<1x8x256xf32, #tpu.memory_space<vmem>>, vector<1x8x256xf32>
    tpu.vector_store %arg7[%c0_48, %c0_49, %c0_50], %126 {strides = array<i32>} : memref<1x8x256xf32, #tpu.memory_space<vmem>>, vector<1x8x256xf32>,
    return
  }
  func.func @transform_0(%arg0: i32) -> (i32, i32, i32) {
    %c0_i32 = arith.constant 0 : i32
    %c0_i32_0 = arith.constant 0 : i32
    %c0_i32_1 = arith.constant 0 : i32
    return %arg0, %c0_i32, %c0_i32_0 : i32, i32, i32
  }
  func.func @transform_1(%arg0: i32) -> (i32, i32, i32) {
    %c0_i32 = arith.constant 0 : i32
    %c0_i32_0 = arith.constant 0 : i32
    %c0_i32_1 = arith.constant 0 : i32
    return %arg0, %c0_i32, %c0_i32_0 : i32, i32, i32
  }
  func.func @transform_2(%arg0: i32) -> (i32, i32, i32) {
    %c0_i32 = arith.constant 0 : i32
    %c0_i32_0 = arith.constant 0 : i32
    %c0_i32_1 = arith.constant 0 : i32
    return %arg0, %c0_i32, %c0_i32_0 : i32, i32, i32
  }
  func.func @transform_3(%arg0: i32) -> (i32, i32, i32) {
    %c0_i32 = arith.constant 0 : i32
    %c0_i32_0 = arith.constant 0 : i32
    %c0_i32_1 = arith.constant 0 : i32
    return %arg0, %c0_i32, %c0_i32_0 : i32, i32, i32
  }
  func.func @transform_4(%arg0: i32) -> (i32, i32, i32) {
    %c0_i32 = arith.constant 0 : i32
    %c0_i32_0 = arith.constant 0 : i32
    %c0_i32_1 = arith.constant 0 : i32
    %c0_i32_2 = arith.constant 0 : i32
    return %c0_i32, %c0_i32_0, %c0_i32_1 : i32, i32, i32
  }
  func.func @transform_5(%arg0: i32) -> (i32, i32) {
    %c0_i32 = arith.constant 0 : i32
    %c0_i32_0 = arith.constant 0 : i32
    %c0_i32_1 = arith.constant 0 : i32
    return %c0_i32, %c0_i32_0 : i32, i32
  }
  func.func @transform_6(%arg0: i32) -> (i32, i32, i32) {
    %c0_i32 = arith.constant 0 : i32
    %c0_i32_0 = arith.constant 0 : i32
    %c0_i32_1 = arith.constant 0 : i32
    return %arg0, %c0_i32, %c0_i32_0 : i32, i32, i32
  }
}

</mosaic_0001>

<llo_original>
// kernel: tpu_custom_call.1
$region0: #{tpu_custom_call.1}
  #allocation0 [shape = 'u32[]', space=smem, size = 0x4, offset = 0x4, fixed_abs, tag = 'smem constant byte address 0x4 - core index']
  #allocation1 [shape = 'u32[144,128]{1,0:T(1,128)}', space=vmem, size = 0x12000, scoped, tag = 'internal scratch']
  %s0 = inlined_call_operand.hbm [shape: bf16[2,8,256], index: 0, kind: input, shape index: {}]
  %s1 = inlined_call_operand.hbm [shape: bf16[2,16,256], index: 1, kind: input, shape index: {}]
  %s2 = inlined_call_operand.hbm [shape: bf16[2,16,256], index: 2, kind: input, shape index: {}]
  %s3 = inlined_call_operand.vmem [shape: bf16[2,8,16], index: 3, kind: input, shape index: {}]
  %s4 = inlined_call_operand.hbm [shape: bf16[4,256,256], index: 4, kind: input, shape index: {}]
  %s5 = inlined_call_operand.vmem [shape: f32[4,256], index: 5, kind: input, shape index: {}]
  %s6 = inlined_call_operand.hbm [shape: f32[2,8,256], index: 6, kind: output, shape index: {}]
  %s7 = sld [smem:[#allocation0]]
  $region73: #{tpu_custom_call.1} parent=0
    _
  %s9 = ssub.s32 1, %s7
  %s10 = scalar_select 0, %s9, %s7
  $region1: #{tpu_custom_call.1} parent=0
    #allocation2 [shape = 'u8[8192]{0}', space=vmem, size = 0x2000, scoped, tag = 'input window, operand 0']
    #allocation3 [shape = 's32[2]{0}', space=sflag, size = 0x8, scoped, tag = 'scoped memory for tpu_custom_call.1']
    #allocation4 [shape = 's32[2]{0}', space=sflag, size = 0x8, scoped, tag = 'scoped memory for tpu_custom_call.1']
    #allocation5 [shape = 'u8[16384]{0}', space=vmem, size = 0x4000, scoped, tag = 'input window, operand 1']
    #allocation6 [shape = 's32[2]{0}', space=sflag, size = 0x8, scoped, tag = 'scoped memory for tpu_custom_call.1']
    #allocation7 [shape = 'u8[16384]{0}', space=vmem, size = 0x4000, scoped, tag = 'input window, operand 2']
    #allocation8 [shape = 'u8[524288]{0}', space=vmem, size = 0x80000, scoped, tag = 'input window, operand 4, single buffered']
    #allocation9 [shape = 's32[1]{0}', space=sflag, size = 0x4, scoped, tag = 'scoped memory for tpu_custom_call.1']
    #allocation10 [shape = 'u8[16384]{0}', space=vmem, size = 0x4000, scoped, tag = 'output window, operand 0']
    %11 = vsyncpa [#allocation3], 0
    %s12 = scalar_lea.sflag [#allocation3], 1
    %13 = vsyncpa %s12, 0
    %14 = vsyncpa [#allocation6], 0
    %s15 = scalar_lea.sflag [#allocation6], 1
    %16 = vsyncpa %s15, 0
    %17 = vsyncpa [#allocation9], 0
    %18 = vsyncpa [#allocation4], 0
    %s19 = scalar_lea.sflag [#allocation4], 1
    %20 = vsyncpa %s19, 0
    loop: start=0, step=1, limit=4
    $region2: #{tpu_custom_call.1} parent=1 // loop_pre_header
      _
    $region3: #{tpu_custom_call.1} parent=1 // loop_header
      %s22 = sphi 0, %s26
      %p23 = scmp.ge.s32.totalorder %s22, 4
      %s32 = sphi 0, %s34
      %s35 = sphi 0, %s32
      %s36 = sphi 0, %s35
      %s52 = sphi 0, %s36
      %s58 = sphi 0, %s60
      %s61 = sphi 0, %s58
      %s62 = sphi 0, %s61
      %s78 = sphi 0, %s62
      %s84 = sphi 0, %s86
      %s87 = sphi 0, %s84
      %s88 = sphi 0, %s87
      %s104 = sphi 0, %s88
      %s110 = sphi 0, %s112
      %s113 = sphi 0, %s110
      %s114 = sphi 0, %s113
      %s130 = sphi 0, %s114
      %s134 = sphi 0, %s134
      %s136 = sphi 0, %s134
      %s137 = sphi 0, %s136
      %s151 = sphi 0, %s137
      %s155 = sphi 0, %s155
      %s157 = sphi 0, %s155
      %s158 = sphi 0, %s157
      %s172 = sphi 0, %s158
      %s178 = sphi 0, %s180
      %s181 = sphi 0, %s178
      %s182 = sphi 0, %s181
      %s198 = sphi 0, %s182
    $region4: #{tpu_custom_call.1} parent=1 // loop_header_branch
      %25 = sbr.rel (%p23) target = $region8
    $region5: #{tpu_custom_call.1} parent=1 // loop_body
      %s27 = ssub.s32 %s22, 1
      %s28 = ssub.s32 %s22, 2
      %s29 = sadd.s32 %s22, 1
      %s30 = ssub.s32 %s22, %s29
      %p31 = scmp.eq.s32.totalorder %s30, 0
      %s33 = sadd.s32 %s32, 1
      %s34 = scalar_select %p31, %s32, %s33
      %p37 = pneg %p31
      %p38 = scmp.eq.s32.totalorder %s22, 1
      %p39 = por %p37, %p38
      %p40 = scmp.ne.s32.totalorder %s32, %s35
      %p41 = scmp.eq.s32.totalorder %s22, 0
      %p42 = por %p40, %p41
      %p43 = scmp.ne.s32.totalorder %s32, %s35
      %p44 = scmp.eq.s32.totalorder %s27, 1
      %p45 = por %p43, %p44
      %p46 = scmp.ne.s32.totalorder %s35, %s36
      %p47 = scmp.eq.s32.totalorder %s27, 0
      %p48 = por %p46, %p47
      %p49 = scmp.ne.s32.totalorder %s35, %s36
      %p50 = scmp.eq.s32.totalorder %s28, 1
      %p51 = por %p49, %p50
      %p53 = scmp.ne.s32.totalorder %s36, %s52
      %p54 = scmp.eq.s32.totalorder %s28, 0
      %p55 = por %p53, %p54
      %s56 = ssub.s32 %s22, %s29
      %p57 = scmp.eq.s32.totalorder %s56, 0
      %s59 = sadd.s32 %s58, 1
      %s60 = scalar_select %p57, %s58, %s59
      %p63 = pneg %p57
      %p64 = scmp.eq.s32.totalorder %s22, 1
      %p65 = por %p63, %p64
      %p66 = scmp.ne.s32.totalorder %s58, %s61
      %p67 = scmp.eq.s32.totalorder %s22, 0
      %p68 = por %p66, %p67
      %p69 = scmp.ne.s32.totalorder %s58, %s61
      %p70 = scmp.eq.s32.totalorder %s27, 1
      %p71 = por %p69, %p70
      %p72 = scmp.ne.s32.totalorder %s61, %s62
      %p73 = scmp.eq.s32.totalorder %s27, 0
      %p74 = por %p72, %p73
      %p75 = scmp.ne.s32.totalorder %s61, %s62
      %p76 = scmp.eq.s32.totalorder %s28, 1
      %p77 = por %p75, %p76
      %p79 = scmp.ne.s32.totalorder %s62, %s78
      %p80 = scmp.eq.s32.totalorder %s28, 0
      %p81 = por %p79, %p80
      %s82 = ssub.s32 %s22, %s29
      %p83 = scmp.eq.s32.totalorder %s82, 0
      %s85 = sadd.s32 %s84, 1
      %s86 = scalar_select %p83, %s84, %s85
      %p89 = pneg %p83
      %p90 = scmp.eq.s32.totalorder %s22, 1
      %p91 = por %p89, %p90
      %p92 = scmp.ne.s32.totalorder %s84, %s87
      %p93 = scmp.eq.s32.totalorder %s22, 0
      %p94 = por %p92, %p93
      %p95 = scmp.ne.s32.totalorder %s84, %s87
      %p96 = scmp.eq.s32.totalorder %s27, 1
      %p97 = por %p95, %p96
      %p98 = scmp.ne.s32.totalorder %s87, %s88
      %p99 = scmp.eq.s32.totalorder %s27, 0
      %p100 = por %p98, %p99
      %p101 = scmp.ne.s32.totalorder %s87, %s88
      %p102 = scmp.eq.s32.totalorder %s28, 1
      %p103 = por %p101, %p102
      %p105 = scmp.ne.s32.totalorder %s88, %s104
      %p106 = scmp.eq.s32.totalorder %s28, 0
      %p107 = por %p105, %p106
      %s108 = ssub.s32 %s22, %s29
      %p109 = scmp.eq.s32.totalorder %s108, 0
      %s111 = sadd.s32 %s110, 1
      %s112 = scalar_select %p109, %s110, %s111
      %p115 = pneg %p109
      %p116 = scmp.eq.s32.totalorder %s22, 1
      %p117 = por %p115, %p116
      %p118 = scmp.ne.s32.totalorder %s110, %s113
      %p119 = scmp.eq.s32.totalorder %s22, 0
      %p120 = por %p118, %p119
      %p121 = scmp.ne.s32.totalorder %s110, %s113
      %p122 = scmp.eq.s32.totalorder %s27, 1
      %p123 = por %p121, %p122
      %p124 = scmp.ne.s32.totalorder %s113, %s114
      %p125 = scmp.eq.s32.totalorder %s27, 0
      %p126 = por %p124, %p125
      %p127 = scmp.ne.s32.totalorder %s113, %s114
      %p128 = scmp.eq.s32.totalorder %s28, 1
      %p129 = por %p127, %p128
      %p131 = scmp.ne.s32.totalorder %s114, %s130
      %p132 = scmp.eq.s32.totalorder %s28, 0
      %p133 = por %p131, %p132
      %s135 = sadd.s32 %s134, 1
      %p138 = scmp.eq.s32.totalorder %s22, 1
      %p139 = scmp.ne.s32.totalorder %s134, %s136
      %p140 = scmp.eq.s32.totalorder %s22, 0
      %p141 = por %p139, %p140
      %p142 = scmp.ne.s32.totalorder %s134, %s136
      %p143 = scmp.eq.s32.totalorder %s27, 1
      %p144 = por %p142, %p143
      %p145 = scmp.ne.s32.totalorder %s136, %s137
      %p146 = scmp.eq.s32.totalorder %s27, 0
      %p147 = por %p145, %p146
      %p148 = scmp.ne.s32.totalorder %s136, %s137
      %p149 = scmp.eq.s32.totalorder %s28, 1
      %p150 = por %p148, %p149
      %p152 = scmp.ne.s32.totalorder %s137, %s151
      %p153 = scmp.eq.s32.totalorder %s28, 0
      %p154 = por %p152, %p153
      %s156 = sadd.s32 %s155, 1
      %p159 = scmp.eq.s32.totalorder %s22, 1
      %p160 = scmp.ne.s32.totalorder %s155, %s157
      %p161 = scmp.eq.s32.totalorder %s22, 0
      %p162 = por %p160, %p161
      %p163 = scmp.ne.s32.totalorder %s155, %s157
      %p164 = scmp.eq.s32.totalorder %s27, 1
      %p165 = por %p163, %p164
      %p166 = scmp.ne.s32.totalorder %s157, %s158
      %p167 = scmp.eq.s32.totalorder %s27, 0
      %p168 = por %p166, %p167
      %p169 = scmp.ne.s32.totalorder %s157, %s158
      %p170 = scmp.eq.s32.totalorder %s28, 1
      %p171 = por %p169, %p170
      %p173 = scmp.ne.s32.totalorder %s158, %s172
      %p174 = scmp.eq.s32.totalorder %s28, 0
      %p175 = por %p173, %p174
      %s176 = ssub.s32 %s22, %s29
      %p177 = scmp.eq.s32.totalorder %s176, 0
      %s179 = sadd.s32 %s178, 1
      %s180 = scalar_select %p177, %s178, %s179
      %p183 = pneg %p177
      %p184 = scmp.eq.s32.totalorder %s22, 1
      %p185 = por %p183, %p184
      %p186 = scmp.ne.s32.totalorder %s178, %s181
      %p187 = scmp.eq.s32.totalorder %s22, 0
      %p188 = por %p186, %p187
      %p189 = scmp.ne.s32.totalorder %s178, %s181
      %p190 = scmp.eq.s32.totalorder %s27, 1
      %p191 = por %p189, %p190
      %p192 = scmp.ne.s32.totalorder %s181, %s182
      %p193 = scmp.eq.s32.totalorder %s27, 0
      %p194 = por %p192, %p193
      %p195 = scmp.ne.s32.totalorder %s181, %s182
      %p196 = scmp.eq.s32.totalorder %s28, 1
      %p197 = por %p195, %p196
      %p199 = scmp.ne.s32.totalorder %s182, %s198
      %p200 = scmp.eq.s32.totalorder %s28, 0
      %p201 = por %p199, %p200
      %p202 = scmp.le.s32.totalorder 1, %s22
      %p203 = scmp.lt.s32.totalorder %s22, 3
      %p204 = pnand %p202, %p203
      %p205 = pneg %p204
      // Predicated region
      $region9: #{tpu_custom_call.1} parent=5 // pred_check
        _
      $region10: #{tpu_custom_call.1} parent=5 // pred_check_branch
        %207 = sbr.rel (%p204) target = $region12
      $region11: #{tpu_custom_call.1} parent=5 // pred_region
        %s208 = ssub.s32 %s22, 1
        // Predicated region
        $region13: #{tpu_custom_call.1} parent=11 // pred_check
          %p209 = pneg %p147
        $region14: #{tpu_custom_call.1} parent=11 // pred_check_branch
          %211 = sbr.rel (%p209) target = $region16
        $region15: #{tpu_custom_call.1} parent=11 // pred_region
          %s213 = ssub.s32 16384, 16384
          %214 = vsyncadd [#allocation9], %s213
          %s215 = sshll.u32 [#allocation8], 4
          %s216 = int_to_ptr.vmem [resolvable:$true] %s215
          %221 = dma.hbm_to_vmem [thread:$0]  %s4, 16384, %s216, [#allocation9], 128, 128, 8
        $region16: #{tpu_custom_call.1} parent=11 // pred_fallthru
          _
        // Predicated region
        $region17: #{tpu_custom_call.1} parent=11 // pred_check
          %p222 = pneg %p168
        $region18: #{tpu_custom_call.1} parent=11 // pred_check_branch
          %224 = sbr.rel (%p222) target = $region20
        $region19: #{tpu_custom_call.1} parent=11 // pred_region
          _
        $region20: #{tpu_custom_call.1} parent=11 // pred_fallthru
          _
      $region12: #{tpu_custom_call.1} parent=5 // pred_fallthru
        _
      %p225 = scmp.lt.s32.totalorder %s22, 2
      // Predicated region
      $region21: #{tpu_custom_call.1} parent=5 // pred_check
        %p226 = pneg %p225
      $region22: #{tpu_custom_call.1} parent=5 // pred_check_branch
        %228 = sbr.rel (%p226) target = $region24
      $region23: #{tpu_custom_call.1} parent=5 // pred_region
        // Predicated region
        $region25: #{tpu_custom_call.1} parent=23 // pred_check
          %p229 = pneg %p42
        $region26: #{tpu_custom_call.1} parent=23 // pred_check_branch
          %231 = sbr.rel (%p229) target = $region28
        $region27: #{tpu_custom_call.1} parent=23 // pred_region
          %s232 = sand.u32 %s32, 1
          %s233 = scalar_lea.sflag [#allocation3], %s232
          %s234 = sand.u32 %s32, 1
          %s235 = smul.addr %s234, 8
          %s236 = scalar_lea.vmem [#allocation2], %s235
          %s238 = ssub.s32 128, 128
          %239 = vsyncadd %s233, %s238
          %s240 = smul.addr %s22, 2
          %s241 = smul.addr %s240, 64
          %s242 = scalar_lea.hbm %s0, %s241
          %s244 = sshll.u32 %s236, 4
          %s245 = int_to_ptr.vmem [resolvable:$true] %s244
          %247 = dma.hbm_to_vmem [thread:$0]  %s242, 128, %s245, %s233
        $region28: #{tpu_custom_call.1} parent=23 // pred_fallthru
          _
        // Predicated region
        $region29: #{tpu_custom_call.1} parent=23 // pred_check
          %p248 = pneg %p68
        $region30: #{tpu_custom_call.1} parent=23 // pred_check_branch
          %250 = sbr.rel (%p248) target = $region32
        $region31: #{tpu_custom_call.1} parent=23 // pred_region
          %s251 = sand.u32 %s22, 1
          %s252 = scalar_lea.sflag [#allocation6], %s251
          %s253 = sand.u32 %s58, 1
          %s254 = smul.addr %s253, 16
          %s255 = scalar_lea.vmem [#allocation5], %s254
          %s257 = ssub.s32 256, 256
          %258 = vsyncadd %s252, %s257
          %s259 = smul.addr %s22, 4
          %s260 = smul.addr %s259, 64
          %s261 = scalar_lea.hbm %s1, %s260
          %s262 = sshll.u32 %s255, 4
          %s263 = int_to_ptr.vmem [resolvable:$true] %s262
          %268 = dma.hbm_to_vmem [thread:$0]  %s261, 256, %s263, %s252, 128, 128, 8
        $region32: #{tpu_custom_call.1} parent=23 // pred_fallthru
          _
        // Predicated region
        $region33: #{tpu_custom_call.1} parent=23 // pred_check
          %p269 = pneg %p94
        $region34: #{tpu_custom_call.1} parent=23 // pred_check_branch
          %271 = sbr.rel (%p269) target = $region36
        $region35: #{tpu_custom_call.1} parent=23 // pred_region
          %s272 = sand.u32 %s22, 1
          %s273 = scalar_lea.sflag [#allocation6], %s272
          %s274 = sand.u32 %s84, 1
          %s275 = smul.addr %s274, 16
          %s276 = scalar_lea.vmem [#allocation7], %s275
          %s278 = ssub.s32 256, 256
          %279 = vsyncadd %s273, %s278
          %s280 = smul.addr %s22, 4
          %s281 = smul.addr %s280, 64
          %s282 = scalar_lea.hbm %s2, %s281
          %s283 = sshll.u32 %s276, 4
          %s284 = int_to_ptr.vmem [resolvable:$true] %s283
          %289 = dma.hbm_to_vmem [thread:$0]  %s282, 256, %s284, %s273, 128, 128, 8
        $region36: #{tpu_custom_call.1} parent=23 // pred_fallthru
          _
        // Predicated region
        $region37: #{tpu_custom_call.1} parent=23 // pred_check
          %p290 = pneg %p120
        $region38: #{tpu_custom_call.1} parent=23 // pred_check_branch
          %292 = sbr.rel (%p290) target = $region40
        $region39: #{tpu_custom_call.1} parent=23 // pred_region
          %p293 = scmp.lt.s32.totalorder %s22, 1
          %s294 = scalar_select %p293, %s22, 1
          %s295 = smul.addr %s294, 4
          %s296 = scalar_lea.vmem %s3, %s295
        $region40: #{tpu_custom_call.1} parent=23 // pred_fallthru
          _
      $region24: #{tpu_custom_call.1} parent=5 // pred_fallthru
        _
      %p297 = scmp.le.s32.totalorder 1, %s22
      %p298 = scmp.lt.s32.totalorder %s22, 3
      %p299 = pnand %p297, %p298
      %p300 = pneg %p299
      // Predicated region
      $region41: #{tpu_custom_call.1} parent=5 // pred_check
        _
      $region42: #{tpu_custom_call.1} parent=5 // pred_check_branch
        %302 = sbr.rel (%p299) target = $region44
      $region43: #{tpu_custom_call.1} parent=5 // pred_region
        %s303 = ssub.s32 %s22, 1
        %s304 = sand.u32 %s35, 1
        %s305 = scalar_lea.sflag [#allocation3], %s304
        %s306 = sand.u32 %s35, 1
        %s307 = smul.addr %s306, 8
        %s308 = scalar_lea.vmem [#allocation2], %s307
        // Predicated region
        $region45: #{tpu_custom_call.1} parent=43 // pred_check
          %p309 = pneg %p48
        $region46: #{tpu_custom_call.1} parent=43 // pred_check_branch
          %311 = sbr.rel (%p309) target = $region48
        $region47: #{tpu_custom_call.1} parent=43 // pred_region
          %312 = dma.done %s305, 128
        $region48: #{tpu_custom_call.1} parent=43 // pred_fallthru
          _
        %s313 = sand.u32 %s27, 1
        %s314 = scalar_lea.sflag [#allocation6], %s313
        %s315 = sand.u32 %s61, 1
        %s316 = smul.addr %s315, 16
        %s317 = scalar_lea.vmem [#allocation5], %s316
        // Predicated region
        $region49: #{tpu_custom_call.1} parent=43 // pred_check
          %p318 = pneg %p74
        $region50: #{tpu_custom_call.1} parent=43 // pred_check_branch
          %320 = sbr.rel (%p318) target = $region52
        $region51: #{tpu_custom_call.1} parent=43 // pred_region
          %321 = dma.done %s314, 256
        $region52: #{tpu_custom_call.1} parent=43 // pred_fallthru
          _
        %s322 = sand.u32 %s27, 1
        %s323 = scalar_lea.sflag [#allocation6], %s322
        %s324 = sand.u32 %s87, 1
        %s325 = smul.addr %s324, 16
        %s326 = scalar_lea.vmem [#allocation7], %s325
        // Predicated region
        $region53: #{tpu_custom_call.1} parent=43 // pred_check
          %p327 = pneg %p100
        $region54: #{tpu_custom_call.1} parent=43 // pred_check_branch
          %329 = sbr.rel (%p327) target = $region56
        $region55: #{tpu_custom_call.1} parent=43 // pred_region
          %330 = dma.done %s323, 256
        $region56: #{tpu_custom_call.1} parent=43 // pred_fallthru
          _
        // Predicated region
        $region57: #{tpu_custom_call.1} parent=43 // pred_check
          %p331 = pneg %p147
        $region58: #{tpu_custom_call.1} parent=43 // pred_check_branch
          %333 = sbr.rel (%p331) target = $region60
        $region59: #{tpu_custom_call.1} parent=43 // pred_region
          %334 = dma.done [#allocation9], 16384
        $region60: #{tpu_custom_call.1} parent=43 // pred_fallthru
          _
        %s335 = sand.u32 %s35, 1
        %s336 = scalar_lea.sflag [#allocation3], %s335
        %s337 = sand.u32 %s35, 1
        %s338 = smul.addr %s337, 8
        %s339 = scalar_lea.vmem [#allocation2], %s338
        %p340 = pneg %p48
        %p341 = pneg %p45
        %s342 = sand.u32 %s27, 1
        %s343 = scalar_lea.sflag [#allocation6], %s342
        %s344 = sand.u32 %s61, 1
        %s345 = smul.addr %s344, 16
        %s346 = scalar_lea.vmem [#allocation5], %s345
        %p347 = pneg %p74
        %p348 = pneg %p71
        %s349 = sand.u32 %s27, 1
        %s350 = scalar_lea.sflag [#allocation6], %s349
        %s351 = sand.u32 %s87, 1
        %s352 = smul.addr %s351, 16
        %s353 = scalar_lea.vmem [#allocation7], %s352
        %p354 = pneg %p100
        %p355 = pneg %p97
        %p356 = scmp.lt.s32.totalorder %s27, 1
        %s357 = scalar_select %p356, %s27, 1
        %s358 = smul.addr %s357, 4
        %s359 = scalar_lea.vmem %s3, %s358
        %p360 = pneg %p126
        %p361 = pneg %p123
        %p362 = pneg %p147
        %p363 = pneg %p144
        %p364 = pneg %p168
        %p365 = pneg %p165
        %p366 = pneg %p194
        %p367 = pneg %p191
        %s368 = sand.u32 %s181, 1
        %s369 = scalar_lea.sflag [#allocation4], %s368
        %s370 = sand.u32 %s181, 1
        %s371 = smul.addr %s370, 16
        %s372 = scalar_lea.vmem [#allocation10], %s371
        %p373 = scmp.lt.s32.totalorder %s27, 1
        %s374 = scalar_select %p373, %s27, 1
        %s375 = smul.addr %s374, 4
        %s376 = scalar_lea.vmem %s3, %s375
        %v378 = vld [vmem:[%s308] sm:$0xff]
        %v379 = vld [vmem:[%s317] sm:$0xff]
        %v380 = vld [vmem:[%s317 + $0x8] sm:$0xff]
        %v381 = vld [vmem:[%s326] sm:$0xff]
        %v382 = vld [vmem:[%s326 + $0x8] sm:$0xff]
        %v383 = vld [vmem:[#allocation8] sm:$0xff]
        %v384 = vld [vmem:[#allocation8 + $0x8] sm:$0xff]
        %v385 = vld [vmem:[#allocation8 + $0x10] sm:$0xff]
        %v386 = vld [vmem:[#allocation8 + $0x18] sm:$0xff]
        %v387 = vld [vmem:[#allocation8 + $0x20] sm:$0xff]
        %v388 = vld [vmem:[#allocation8 + $0x28] sm:$0xff]
        %v389 = vld [vmem:[#allocation8 + $0x30] sm:$0xff]
        %v390 = vld [vmem:[#allocation8 + $0x38] sm:$0xff]
        %v391 = vld [vmem:[#allocation8 + $0x40] sm:$0xff]
        %v392 = vld [vmem:[#allocation8 + $0x48] sm:$0xff]
        %v393 = vld [vmem:[#allocation8 + $0x50] sm:$0xff]
        %v394 = vld [vmem:[#allocation8 + $0x58] sm:$0xff]
        %v395 = vld [vmem:[#allocation8 + $0x60] sm:$0xff]
        %v396 = vld [vmem:[#allocation8 + $0x68] sm:$0xff]
        %v397 = vld [vmem:[#allocation8 + $0x70] sm:$0xff]
        %v398 = vld [vmem:[#allocation8 + $0x78] sm:$0xff]
        %v399 = vld [vmem:[#allocation8 + $0x80] sm:$0xff]
        %v400 = vld [vmem:[#allocation8 + $0x88] sm:$0xff]
        %v401 = vld [vmem:[#allocation8 + $0x90] sm:$0xff]
        %v402 = vld [vmem:[#allocation8 + $0x98] sm:$0xff]
        %v403 = vld [vmem:[#allocation8 + $0xa0] sm:$0xff]
        %v404 = vld [vmem:[#allocation8 + $0xa8] sm:$0xff]
        %v405 = vld [vmem:[#allocation8 + $0xb0] sm:$0xff]
        %v406 = vld [vmem:[#allocation8 + $0xb8] sm:$0xff]
        %v407 = vld [vmem:[#allocation8 + $0xc0] sm:$0xff]
        %v408 = vld [vmem:[#allocation8 + $0xc8] sm:$0xff]
        %v409 = vld [vmem:[#allocation8 + $0xd0] sm:$0xff]
        %v410 = vld [vmem:[#allocation8 + $0xd8] sm:$0xff]
        %v411 = vld [vmem:[#allocation8 + $0xe0] sm:$0xff]
        %v412 = vld [vmem:[#allocation8 + $0xe8] sm:$0xff]
        %v413 = vld [vmem:[#allocation8 + $0xf0] sm:$0xff]
        %v414 = vld [vmem:[#allocation8 + $0xf8] sm:$0xff]
        %v415 = vld [vmem:[%s5] ss:$4 sm:$0x3]
        %v417 = vlaneseq
        %v418 = vshrl.u32 %v417, 7
        %v419 = vsub.s32 0, %v418
        %v420 = vrot.slane %v415, %v419
        %v421 = vlaneseq
        %v422 = vshrl.u32 %v421, 7
        %v423 = vsub.s32 1, %v422
        %v424 = vrot.slane %v415, %v423
        %v428 = vunpack.c.l.b16 %v378
        %v429 = vunpack.c.h.b16 %v378
        %v430 = vpack.c.b16 %v428, %v428
        %v431 = vpack.c.b16 %v429, %v429
        %v466 = vunpack.c.l.b16 %v383
        %v467 = vunpack.c.h.b16 %v383
        %v468 = vunpack.c.l.b16 %v384
        %v469 = vunpack.c.h.b16 %v384
        %v470 = vunpack.c.l.b16 %v385
        %v471 = vunpack.c.h.b16 %v385
        %v472 = vunpack.c.l.b16 %v386
        %v473 = vunpack.c.h.b16 %v386
        %v474 = vunpack.c.l.b16 %v387
        %v475 = vunpack.c.h.b16 %v387
        %v476 = vunpack.c.l.b16 %v388
        %v477 = vunpack.c.h.b16 %v388
        %v478 = vunpack.c.l.b16 %v389
        %v479 = vunpack.c.h.b16 %v389
        %v480 = vunpack.c.l.b16 %v390
        %v481 = vunpack.c.h.b16 %v390
        %v482 = vunpack.c.l.b16 %v391
        %v483 = vunpack.c.h.b16 %v391
        %v484 = vunpack.c.l.b16 %v392
        %v485 = vunpack.c.h.b16 %v392
        %v486 = vunpack.c.l.b16 %v393
        %v487 = vunpack.c.h.b16 %v393
        %v488 = vunpack.c.l.b16 %v394
        %v489 = vunpack.c.h.b16 %v394
        %v490 = vunpack.c.l.b16 %v395
        %v491 = vunpack.c.h.b16 %v395
        %v492 = vunpack.c.l.b16 %v396
        %v493 = vunpack.c.h.b16 %v396
        %v494 = vunpack.c.l.b16 %v397
        %v495 = vunpack.c.h.b16 %v397
        %v496 = vunpack.c.l.b16 %v398
        %v497 = vunpack.c.h.b16 %v398
        %v498 = vunpack.c.l.b16 %v399
        %v499 = vunpack.c.h.b16 %v399
        %v500 = vunpack.c.l.b16 %v400
        %v501 = vunpack.c.h.b16 %v400
        %v502 = vunpack.c.l.b16 %v401
        %v503 = vunpack.c.h.b16 %v401
        %v504 = vunpack.c.l.b16 %v402
        %v505 = vunpack.c.h.b16 %v402
        %v506 = vunpack.c.l.b16 %v403
        %v507 = vunpack.c.h.b16 %v403
        %v508 = vunpack.c.l.b16 %v404
        %v509 = vunpack.c.h.b16 %v404
        %v510 = vunpack.c.l.b16 %v405
        %v511 = vunpack.c.h.b16 %v405
        %v512 = vunpack.c.l.b16 %v406
        %v513 = vunpack.c.h.b16 %v406
        %v514 = vunpack.c.l.b16 %v407
        %v515 = vunpack.c.h.b16 %v407
        %v516 = vunpack.c.l.b16 %v408
        %v517 = vunpack.c.h.b16 %v408
        %v518 = vunpack.c.l.b16 %v409
        %v519 = vunpack.c.h.b16 %v409
        %v520 = vunpack.c.l.b16 %v410
        %v521 = vunpack.c.h.b16 %v410
        %v522 = vunpack.c.l.b16 %v411
        %v523 = vunpack.c.h.b16 %v411
        %v524 = vunpack.c.l.b16 %v412
        %v525 = vunpack.c.h.b16 %v412
        %v526 = vunpack.c.l.b16 %v413
        %v527 = vunpack.c.h.b16 %v413
        %v528 = vunpack.c.l.b16 %v414
        %v529 = vunpack.c.h.b16 %v414
        %v530 = vpack.c.b16 %v468, %v466
        %v531 = vpack.c.b16 %v469, %v467
        %v532 = vpack.c.b16 %v472, %v470
        %v533 = vpack.c.b16 %v473, %v471
        %v534 = vpack.c.b16 %v476, %v474
        %v535 = vpack.c.b16 %v477, %v475
        %v536 = vpack.c.b16 %v480, %v478
        %v537 = vpack.c.b16 %v481, %v479
        %v538 = vpack.c.b16 %v484, %v482
        %v539 = vpack.c.b16 %v485, %v483
        %v540 = vpack.c.b16 %v488, %v486
        %v541 = vpack.c.b16 %v489, %v487
        %v542 = vpack.c.b16 %v492, %v490
        %v543 = vpack.c.b16 %v493, %v491
        %v544 = vpack.c.b16 %v496, %v494
        %v545 = vpack.c.b16 %v497, %v495
        %v546 = vpack.c.b16 %v500, %v498
        %v547 = vpack.c.b16 %v501, %v499
        %v548 = vpack.c.b16 %v504, %v502
        %v549 = vpack.c.b16 %v505, %v503
        %v550 = vpack.c.b16 %v508, %v506
        %v551 = vpack.c.b16 %v509, %v507
        %v552 = vpack.c.b16 %v512, %v510
        %v553 = vpack.c.b16 %v513, %v511
        %v554 = vpack.c.b16 %v516, %v514
        %v555 = vpack.c.b16 %v517, %v515
        %v556 = vpack.c.b16 %v520, %v518
        %v557 = vpack.c.b16 %v521, %v519
        %v558 = vpack.c.b16 %v524, %v522
        %v559 = vpack.c.b16 %v525, %v523
        %v560 = vpack.c.b16 %v528, %v526
        %v561 = vpack.c.b16 %v529, %v527
        %594 = vmatprep.subr.bf16.mxu0 %v531
        %595 = vmatpush1.bf16.msra.mxu0 %v530
        %596 = vmatprep.subr.bf16.mxu0 %v533
        %597 = vmatpush1.bf16.msra.mxu0 %v532
        %598 = vmatprep.subr.bf16.mxu0 %v535
        %599 = vmatpush1.bf16.msra.mxu0 %v534
        %600 = vmatprep.subr.bf16.mxu0 %v537
        %601 = vmatpush1.bf16.msra.mxu0 %v536
        %602 = vmatprep.subr.bf16.mxu0 %v539
        %603 = vmatpush1.bf16.msra.mxu0 %v538
        %604 = vmatprep.subr.bf16.mxu0 %v541
        %605 = vmatpush1.bf16.msra.mxu0 %v540
        %606 = vmatprep.subr.bf16.mxu0 %v543
        %607 = vmatpush1.bf16.msra.mxu0 %v542
        %608 = vmatprep.subr.bf16.mxu0 %v545
        %609 = vmatpush1.bf16.msra.mxu0 %v544
        %610 = vmatprep.subr.bf16.mxu0 %v547
        %611 = vmatpush1.bf16.msra.mxu0 %v546
        %612 = vmatprep.subr.bf16.mxu0 %v549
        %613 = vmatpush1.bf16.msra.mxu0 %v548
        %614 = vmatprep.subr.bf16.mxu0 %v551
        %615 = vmatpush1.bf16.msra.mxu0 %v550
        %616 = vmatprep.subr.bf16.mxu0 %v553
        %617 = vmatpush1.bf16.msra.mxu0 %v552
        %618 = vmatprep.subr.bf16.mxu0 %v555
        %619 = vmatpush1.bf16.msra.mxu0 %v554
        %620 = vmatprep.subr.bf16.mxu0 %v557
        %621 = vmatpush1.bf16.msra.mxu0 %v556
        %622 = vmatprep.subr.bf16.mxu0 %v559
        %623 = vmatpush1.bf16.msra.mxu0 %v558
        %624 = vmatprep.subr.bf16.mxu0 %v561
        %625 = vmatpush1.bf16.msra.mxu0 %v560
        %626 = vmatprep.mubr.bf16.mxu0 %v431
        %627 = vmatmul.mubr.bf16.gmra.mrb[0].mxu0 %v430
        %v628 = vpop.f32.mrb[0].mxu0
        %v629 = vadd.f32 %v420, %v628
        %v630 = vpop.f32.mrb[0].mxu0
        %v631 = vadd.f32 %v424, %v630
        %v632 = vpop.f32.mrb[0].mxu0
        %v633 = vpop.f32.mrb[0].mxu0
        %634 = vdwg.mxu0
        %v635 = vmul.f32 %v629, 0.125
        %v636 = vmul.f32 %v631, 0.125
        %v637 = vpack.c.bf16 %v635, %v635
        %v638 = vpack.c.bf16 %v636, %v636
        %s639 = scalar_lea.vmem [#allocation8], 256
        %v640 = vld [vmem:[%s639] sm:$0xff]
        %v641 = vld [vmem:[%s639 + $0x8] sm:$0xff]
        %v642 = vld [vmem:[%s639 + $0x10] sm:$0xff]
        %v643 = vld [vmem:[%s639 + $0x18] sm:$0xff]
        %v644 = vld [vmem:[%s639 + $0x20] sm:$0xff]
        %v645 = vld [vmem:[%s639 + $0x28] sm:$0xff]
        %v646 = vld [vmem:[%s639 + $0x30] sm:$0xff]
        %v647 = vld [vmem:[%s639 + $0x38] sm:$0xff]
        %v648 = vld [vmem:[%s639 + $0x40] sm:$0xff]
        %v649 = vld [vmem:[%s639 + $0x48] sm:$0xff]
        %v650 = vld [vmem:[%s639 + $0x50] sm:$0xff]
        %v651 = vld [vmem:[%s639 + $0x58] sm:$0xff]
        %v652 = vld [vmem:[%s639 + $0x60] sm:$0xff]
        %v653 = vld [vmem:[%s639 + $0x68] sm:$0xff]
        %v654 = vld [vmem:[%s639 + $0x70] sm:$0xff]
        %v655 = vld [vmem:[%s639 + $0x78] sm:$0xff]
        %v656 = vld [vmem:[%s639 + $0x80] sm:$0xff]
        %v657 = vld [vmem:[%s639 + $0x88] sm:$0xff]
        %v658 = vld [vmem:[%s639 + $0x90] sm:$0xff]
        %v659 = vld [vmem:[%s639 + $0x98] sm:$0xff]
        %v660 = vld [vmem:[%s639 + $0xa0] sm:$0xff]
        %v661 = vld [vmem:[%s639 + $0xa8] sm:$0xff]
        %v662 = vld [vmem:[%s639 + $0xb0] sm:$0xff]
        %v663 = vld [vmem:[%s639 + $0xb8] sm:$0xff]
        %v664 = vld [vmem:[%s639 + $0xc0] sm:$0xff]
        %v665 = vld [vmem:[%s639 + $0xc8] sm:$0xff]
        %v666 = vld [vmem:[%s639 + $0xd0] sm:$0xff]
        %v667 = vld [vmem:[%s639 + $0xd8] sm:$0xff]
        %v668 = vld [vmem:[%s639 + $0xe0] sm:$0xff]
        %v669 = vld [vmem:[%s639 + $0xe8] sm:$0xff]
        %v670 = vld [vmem:[%s639 + $0xf0] sm:$0xff]
        %v671 = vld [vmem:[%s639 + $0xf8] sm:$0xff]
        %s672 = scalar_lea.vmem %s5, 1
        %v673 = vld [vmem:[%s672] ss:$4 sm:$0x3]
        %v675 = vlaneseq
        %v676 = vshrl.u32 %v675, 7
        %v677 = vsub.s32 0, %v676
        %v678 = vrot.slane %v673, %v677
        %v679 = vlaneseq
        %v680 = vshrl.u32 %v679, 7
        %v681 = vsub.s32 1, %v680
        %v682 = vrot.slane %v673, %v681
        %v687 = vunpack.c.l.b16 %v379
        %v688 = vunpack.c.h.b16 %v379
        %v689 = vunpack.c.l.b16 %v380
        %v690 = vunpack.c.h.b16 %v380
        %v691 = vpack.c.b16 %v689, %v687
        %v692 = vpack.c.b16 %v690, %v688
        %v727 = vunpack.c.l.b16 %v640
        %v728 = vunpack.c.h.b16 %v640
        %v729 = vunpack.c.l.b16 %v641
        %v730 = vunpack.c.h.b16 %v641
        %v731 = vunpack.c.l.b16 %v642
        %v732 = vunpack.c.h.b16 %v642
        %v733 = vunpack.c.l.b16 %v643
        %v734 = vunpack.c.h.b16 %v643
        %v735 = vunpack.c.l.b16 %v644
        %v736 = vunpack.c.h.b16 %v644
        %v737 = vunpack.c.l.b16 %v645
        %v738 = vunpack.c.h.b16 %v645
        %v739 = vunpack.c.l.b16 %v646
        %v740 = vunpack.c.h.b16 %v646
        %v741 = vunpack.c.l.b16 %v647
        %v742 = vunpack.c.h.b16 %v647
        %v743 = vunpack.c.l.b16 %v648
        %v744 = vunpack.c.h.b16 %v648
        %v745 = vunpack.c.l.b16 %v649
        %v746 = vunpack.c.h.b16 %v649
        %v747 = vunpack.c.l.b16 %v650
        %v748 = vunpack.c.h.b16 %v650
        %v749 = vunpack.c.l.b16 %v651
        %v750 = vunpack.c.h.b16 %v651
        %v751 = vunpack.c.l.b16 %v652
        %v752 = vunpack.c.h.b16 %v652
        %v753 = vunpack.c.l.b16 %v653
        %v754 = vunpack.c.h.b16 %v653
        %v755 = vunpack.c.l.b16 %v654
        %v756 = vunpack.c.h.b16 %v654
        %v757 = vunpack.c.l.b16 %v655
        %v758 = vunpack.c.h.b16 %v655
        %v759 = vunpack.c.l.b16 %v656
        %v760 = vunpack.c.h.b16 %v656
        %v761 = vunpack.c.l.b16 %v657
        %v762 = vunpack.c.h.b16 %v657
        %v763 = vunpack.c.l.b16 %v658
        %v764 = vunpack.c.h.b16 %v658
        %v765 = vunpack.c.l.b16 %v659
        %v766 = vunpack.c.h.b16 %v659
        %v767 = vunpack.c.l.b16 %v660
        %v768 = vunpack.c.h.b16 %v660
        %v769 = vunpack.c.l.b16 %v661
        %v770 = vunpack.c.h.b16 %v661
        %v771 = vunpack.c.l.b16 %v662
        %v772 = vunpack.c.h.b16 %v662
        %v773 = vunpack.c.l.b16 %v663
        %v774 = vunpack.c.h.b16 %v663
        %v775 = vunpack.c.l.b16 %v664
        %v776 = vunpack.c.h.b16 %v664
        %v777 = vunpack.c.l.b16 %v665
        %v778 = vunpack.c.h.b16 %v665
        %v779 = vunpack.c.l.b16 %v666
        %v780 = vunpack.c.h.b16 %v666
        %v781 = vunpack.c.l.b16 %v667
        %v782 = vunpack.c.h.b16 %v667
        %v783 = vunpack.c.l.b16 %v668
        %v784 = vunpack.c.h.b16 %v668
        %v785 = vunpack.c.l.b16 %v669
        %v786 = vunpack.c.h.b16 %v669
        %v787 = vunpack.c.l.b16 %v670
        %v788 = vunpack.c.h.b16 %v670
        %v789 = vunpack.c.l.b16 %v671
        %v790 = vunpack.c.h.b16 %v671
        %v791 = vpack.c.b16 %v729, %v727
        %v792 = vpack.c.b16 %v730, %v728
        %v793 = vpack.c.b16 %v733, %v731
        %v794 = vpack.c.b16 %v734, %v732
        %v795 = vpack.c.b16 %v737, %v735
        %v796 = vpack.c.b16 %v738, %v736
        %v797 = vpack.c.b16 %v741, %v739
        %v798 = vpack.c.b16 %v742, %v740
        %v799 = vpack.c.b16 %v745, %v743
        %v800 = vpack.c.b16 %v746, %v744
        %v801 = vpack.c.b16 %v749, %v747
        %v802 = vpack.c.b16 %v750, %v748
        %v803 = vpack.c.b16 %v753, %v751
        %v804 = vpack.c.b16 %v754, %v752
        %v805 = vpack.c.b16 %v757, %v755
        %v806 = vpack.c.b16 %v758, %v756
        %v807 = vpack.c.b16 %v761, %v759
        %v808 = vpack.c.b16 %v762, %v760
        %v809 = vpack.c.b16 %v765, %v763
        %v810 = vpack.c.b16 %v766, %v764
        %v811 = vpack.c.b16 %v769, %v767
        %v812 = vpack.c.b16 %v770, %v768
        %v813 = vpack.c.b16 %v773, %v771
        %v814 = vpack.c.b16 %v774, %v772
        %v815 = vpack.c.b16 %v777, %v775
        %v816 = vpack.c.b16 %v778, %v776
        %v817 = vpack.c.b16 %v781, %v779
        %v818 = vpack.c.b16 %v782, %v780
        %v819 = vpack.c.b16 %v785, %v783
        %v820 = vpack.c.b16 %v786, %v784
        %v821 = vpack.c.b16 %v789, %v787
        %v822 = vpack.c.b16 %v790, %v788
        %855 = vmatprep.subr.bf16.mxu0 %v792
        %856 = vmatpush1.bf16.msra.mxu0 %v791
        %857 = vmatprep.subr.bf16.mxu0 %v794
        %858 = vmatpush1.bf16.msra.mxu0 %v793
        %859 = vmatprep.subr.bf16.mxu0 %v796
        %860 = vmatpush1.bf16.msra.mxu0 %v795
        %861 = vmatprep.subr.bf16.mxu0 %v798
        %862 = vmatpush1.bf16.msra.mxu0 %v797
        %863 = vmatprep.subr.bf16.mxu0 %v800
        %864 = vmatpush1.bf16.msra.mxu0 %v799
        %865 = vmatprep.subr.bf16.mxu0 %v802
        %866 = vmatpush1.bf16.msra.mxu0 %v801
        %867 = vmatprep.subr.bf16.mxu0 %v804
        %868 = vmatpush1.bf16.msra.mxu0 %v803
        %869 = vmatprep.subr.bf16.mxu0 %v806
        %870 = vmatpush1.bf16.msra.mxu0 %v805
        %871 = vmatprep.subr.bf16.mxu0 %v808
        %872 = vmatpush1.bf16.msra.mxu0 %v807
        %873 = vmatprep.subr.bf16.mxu0 %v810
        %874 = vmatpush1.bf16.msra.mxu0 %v809
        %875 = vmatprep.subr.bf16.mxu0 %v812
        %876 = vmatpush1.bf16.msra.mxu0 %v811
        %877 = vmatprep.subr.bf16.mxu0 %v814
        %878 = vmatpush1.bf16.msra.mxu0 %v813
        %879 = vmatprep.subr.bf16.mxu0 %v816
        %880 = vmatpush1.bf16.msra.mxu0 %v815
        %881 = vmatprep.subr.bf16.mxu0 %v818
        %882 = vmatpush1.bf16.msra.mxu0 %v817
        %883 = vmatprep.subr.bf16.mxu0 %v820
        %884 = vmatpush1.bf16.msra.mxu0 %v819
        %885 = vmatprep.subr.bf16.mxu0 %v822
        %886 = vmatpush1.bf16.msra.mxu0 %v821
        %887 = vmatprep.mubr.bf16.mxu0 %v692
        %888 = vmatmul.mubr.bf16.gmra.mrb[0].mxu0 %v691
        %v889 = vpop.f32.mrb[0].mxu0
        %v890 = vadd.f32 %v678, %v889
        %v891 = vpop.f32.mrb[0].mxu0
        %v892 = vadd.f32 %v682, %v891
        %v893 = vpop.f32.mrb[0].mxu0
        %v894 = vadd.f32 %v678, %v893
        %v895 = vpop.f32.mrb[0].mxu0
        %v896 = vadd.f32 %v682, %v895
        %897 = vdwg.mxu0
        %v898 = vpack.c.bf16 %v894, %v890
        %v899 = vpack.c.bf16 %v896, %v892
        %s900 = scalar_lea.vmem [#allocation8], 512
        %v901 = vld [vmem:[%s900] sm:$0xff]
        %v902 = vld [vmem:[%s900 + $0x8] sm:$0xff]
        %v903 = vld [vmem:[%s900 + $0x10] sm:$0xff]
        %v904 = vld [vmem:[%s900 + $0x18] sm:$0xff]
        %v905 = vld [vmem:[%s900 + $0x20] sm:$0xff]
        %v906 = vld [vmem:[%s900 + $0x28] sm:$0xff]
        %v907 = vld [vmem:[%s900 + $0x30] sm:$0xff]
        %v908 = vld [vmem:[%s900 + $0x38] sm:$0xff]
        %v909 = vld [vmem:[%s900 + $0x40] sm:$0xff]
        %v910 = vld [vmem:[%s900 + $0x48] sm:$0xff]
        %v911 = vld [vmem:[%s900 + $0x50] sm:$0xff]
        %v912 = vld [vmem:[%s900 + $0x58] sm:$0xff]
        %v913 = vld [vmem:[%s900 + $0x60] sm:$0xff]
        %v914 = vld [vmem:[%s900 + $0x68] sm:$0xff]
        %v915 = vld [vmem:[%s900 + $0x70] sm:$0xff]
        %v916 = vld [vmem:[%s900 + $0x78] sm:$0xff]
        %v917 = vld [vmem:[%s900 + $0x80] sm:$0xff]
        %v918 = vld [vmem:[%s900 + $0x88] sm:$0xff]
        %v919 = vld [vmem:[%s900 + $0x90] sm:$0xff]
        %v920 = vld [vmem:[%s900 + $0x98] sm:$0xff]
        %v921 = vld [vmem:[%s900 + $0xa0] sm:$0xff]
        %v922 = vld [vmem:[%s900 + $0xa8] sm:$0xff]
        %v923 = vld [vmem:[%s900 + $0xb0] sm:$0xff]
        %v924 = vld [vmem:[%s900 + $0xb8] sm:$0xff]
        %v925 = vld [vmem:[%s900 + $0xc0] sm:$0xff]
        %v926 = vld [vmem:[%s900 + $0xc8] sm:$0xff]
        %v927 = vld [vmem:[%s900 + $0xd0] sm:$0xff]
        %v928 = vld [vmem:[%s900 + $0xd8] sm:$0xff]
        %v929 = vld [vmem:[%s900 + $0xe0] sm:$0xff]
        %v930 = vld [vmem:[%s900 + $0xe8] sm:$0xff]
        %v931 = vld [vmem:[%s900 + $0xf0] sm:$0xff]
        %v932 = vld [vmem:[%s900 + $0xf8] sm:$0xff]
        %s933 = scalar_lea.vmem %s5, 2
        %v934 = vld [vmem:[%s933] ss:$4 sm:$0x3]
        %v936 = vlaneseq
        %v937 = vshrl.u32 %v936, 7
        %v938 = vsub.s32 0, %v937
        %v939 = vrot.slane %v934, %v938
        %v940 = vlaneseq
        %v941 = vshrl.u32 %v940, 7
        %v942 = vsub.s32 1, %v941
        %v943 = vrot.slane %v934, %v942
        %v948 = vunpack.c.l.b16 %v381
        %v949 = vunpack.c.h.b16 %v381
        %v950 = vunpack.c.l.b16 %v382
        %v951 = vunpack.c.h.b16 %v382
        %v952 = vpack.c.b16 %v950, %v948
        %v953 = vpack.c.b16 %v951, %v949
        %v988 = vunpack.c.l.b16 %v901
        %v989 = vunpack.c.h.b16 %v901
        %v990 = vunpack.c.l.b16 %v902
        %v991 = vunpack.c.h.b16 %v902
        %v992 = vunpack.c.l.b16 %v903
        %v993 = vunpack.c.h.b16 %v903
        %v994 = vunpack.c.l.b16 %v904
        %v995 = vunpack.c.h.b16 %v904
        %v996 = vunpack.c.l.b16 %v905
        %v997 = vunpack.c.h.b16 %v905
        %v998 = vunpack.c.l.b16 %v906
        %v999 = vunpack.c.h.b16 %v906
        %v1000 = vunpack.c.l.b16 %v907
        %v1001 = vunpack.c.h.b16 %v907
        %v1002 = vunpack.c.l.b16 %v908
        %v1003 = vunpack.c.h.b16 %v908
        %v1004 = vunpack.c.l.b16 %v909
        %v1005 = vunpack.c.h.b16 %v909
        %v1006 = vunpack.c.l.b16 %v910
        %v1007 = vunpack.c.h.b16 %v910
        %v1008 = vunpack.c.l.b16 %v911
        %v1009 = vunpack.c.h.b16 %v911
        %v1010 = vunpack.c.l.b16 %v912
        %v1011 = vunpack.c.h.b16 %v912
        %v1012 = vunpack.c.l.b16 %v913
        %v1013 = vunpack.c.h.b16 %v913
        %v1014 = vunpack.c.l.b16 %v914
        %v1015 = vunpack.c.h.b16 %v914
        %v1016 = vunpack.c.l.b16 %v915
        %v1017 = vunpack.c.h.b16 %v915
        %v1018 = vunpack.c.l.b16 %v916
        %v1019 = vunpack.c.h.b16 %v916
        %v1020 = vunpack.c.l.b16 %v917
        %v1021 = vunpack.c.h.b16 %v917
        %v1022 = vunpack.c.l.b16 %v918
        %v1023 = vunpack.c.h.b16 %v918
        %v1024 = vunpack.c.l.b16 %v919
        %v1025 = vunpack.c.h.b16 %v919
        %v1026 = vunpack.c.l.b16 %v920
        %v1027 = vunpack.c.h.b16 %v920
        %v1028 = vunpack.c.l.b16 %v921
        %v1029 = vunpack.c.h.b16 %v921
        %v1030 = vunpack.c.l.b16 %v922
        %v1031 = vunpack.c.h.b16 %v922
        %v1032 = vunpack.c.l.b16 %v923
        %v1033 = vunpack.c.h.b16 %v923
        %v1034 = vunpack.c.l.b16 %v924
        %v1035 = vunpack.c.h.b16 %v924
        %v1036 = vunpack.c.l.b16 %v925
        %v1037 = vunpack.c.h.b16 %v925
        %v1038 = vunpack.c.l.b16 %v926
        %v1039 = vunpack.c.h.b16 %v926
        %v1040 = vunpack.c.l.b16 %v927
        %v1041 = vunpack.c.h.b16 %v927
        %v1042 = vunpack.c.l.b16 %v928
        %v1043 = vunpack.c.h.b16 %v928
        %v1044 = vunpack.c.l.b16 %v929
        %v1045 = vunpack.c.h.b16 %v929
        %v1046 = vunpack.c.l.b16 %v930
        %v1047 = vunpack.c.h.b16 %v930
        %v1048 = vunpack.c.l.b16 %v931
        %v1049 = vunpack.c.h.b16 %v931
        %v1050 = vunpack.c.l.b16 %v932
        %v1051 = vunpack.c.h.b16 %v932
        %v1052 = vpack.c.b16 %v990, %v988
        %v1053 = vpack.c.b16 %v991, %v989
        %v1054 = vpack.c.b16 %v994, %v992
        %v1055 = vpack.c.b16 %v995, %v993
        %v1056 = vpack.c.b16 %v998, %v996
        %v1057 = vpack.c.b16 %v999, %v997
        %v1058 = vpack.c.b16 %v1002, %v1000
        %v1059 = vpack.c.b16 %v1003, %v1001
        %v1060 = vpack.c.b16 %v1006, %v1004
        %v1061 = vpack.c.b16 %v1007, %v1005
        %v1062 = vpack.c.b16 %v1010, %v1008
        %v1063 = vpack.c.b16 %v1011, %v1009
        %v1064 = vpack.c.b16 %v1014, %v1012
        %v1065 = vpack.c.b16 %v1015, %v1013
        %v1066 = vpack.c.b16 %v1018, %v1016
        %v1067 = vpack.c.b16 %v1019, %v1017
        %v1068 = vpack.c.b16 %v1022, %v1020
        %v1069 = vpack.c.b16 %v1023, %v1021
        %v1070 = vpack.c.b16 %v1026, %v1024
        %v1071 = vpack.c.b16 %v1027, %v1025
        %v1072 = vpack.c.b16 %v1030, %v1028
        %v1073 = vpack.c.b16 %v1031, %v1029
        %v1074 = vpack.c.b16 %v1034, %v1032
        %v1075 = vpack.c.b16 %v1035, %v1033
        %v1076 = vpack.c.b16 %v1038, %v1036
        %v1077 = vpack.c.b16 %v1039, %v1037
        %v1078 = vpack.c.b16 %v1042, %v1040
        %v1079 = vpack.c.b16 %v1043, %v1041
        %v1080 = vpack.c.b16 %v1046, %v1044
        %v1081 = vpack.c.b16 %v1047, %v1045
        %v1082 = vpack.c.b16 %v1050, %v1048
        %v1083 = vpack.c.b16 %v1051, %v1049
        %1116 = vmatprep.subr.bf16.mxu0 %v1053
        %1117 = vmatpush1.bf16.msra.mxu0 %v1052
        %1118 = vmatprep.subr.bf16.mxu0 %v1055
        %1119 = vmatpush1.bf16.msra.mxu0 %v1054
        %1120 = vmatprep.subr.bf16.mxu0 %v1057
        %1121 = vmatpush1.bf16.msra.mxu0 %v1056
        %1122 = vmatprep.subr.bf16.mxu0 %v1059
        %1123 = vmatpush1.bf16.msra.mxu0 %v1058
        %1124 = vmatprep.subr.bf16.mxu0 %v1061
        %1125 = vmatpush1.bf16.msra.mxu0 %v1060
        %1126 = vmatprep.subr.bf16.mxu0 %v1063
        %1127 = vmatpush1.bf16.msra.mxu0 %v1062
        %1128 = vmatprep.subr.bf16.mxu0 %v1065
        %1129 = vmatpush1.bf16.msra.mxu0 %v1064
        %1130 = vmatprep.subr.bf16.mxu0 %v1067
        %1131 = vmatpush1.bf16.msra.mxu0 %v1066
        %1132 = vmatprep.subr.bf16.mxu0 %v1069
        %1133 = vmatpush1.bf16.msra.mxu0 %v1068
        %1134 = vmatprep.subr.bf16.mxu0 %v1071
        %1135 = vmatpush1.bf16.msra.mxu0 %v1070
        %1136 = vmatprep.subr.bf16.mxu0 %v1073
        %1137 = vmatpush1.bf16.msra.mxu0 %v1072
        %1138 = vmatprep.subr.bf16.mxu0 %v1075
        %1139 = vmatpush1.bf16.msra.mxu0 %v1074
        %1140 = vmatprep.subr.bf16.mxu0 %v1077
        %1141 = vmatpush1.bf16.msra.mxu0 %v1076
        %1142 = vmatprep.subr.bf16.mxu0 %v1079
        %1143 = vmatpush1.bf16.msra.mxu0 %v1078
        %1144 = vmatprep.subr.bf16.mxu0 %v1081
        %1145 = vmatpush1.bf16.msra.mxu0 %v1080
        %1146 = vmatprep.subr.bf16.mxu0 %v1083
        %1147 = vmatpush1.bf16.msra.mxu0 %v1082
        %1148 = vmatprep.mubr.bf16.mxu0 %v953
        %1149 = vmatmul.mubr.bf16.gmra.mrb[0].mxu0 %v952
        %v1150 = vpop.f32.mrb[0].mxu0
        %v1151 = vadd.f32 %v939, %v1150
        %v1152 = vpop.f32.mrb[0].mxu0
        %v1153 = vadd.f32 %v943, %v1152
        %v1154 = vpop.f32.mrb[0].mxu0
        %v1155 = vadd.f32 %v939, %v1154
        %v1156 = vpop.f32.mrb[0].mxu0
        %v1157 = vadd.f32 %v943, %v1156
        %1158 = vdwg.mxu0
        %v1159 = vpack.c.bf16 %v1155, %v1151
        %v1160 = vpack.c.bf16 %v1157, %v1153
        %v1161 = vld [vmem:[%s376] sm:$0xf]
        %v1162 = vunpack.c.l.bf16 %v1161
        %vm1163 = vcmask 523264
        %v1165 = vsel %vm1163, %v637, 0
        %v1168 = vsel %vm1163, %v898, 0
        %1170 = vmatprep.subr.bf16.mxu0 0
        %1171 = vmatpush1.bf16.xpose.msra.mxu0 %v1168
        %1172 = vmatprep.subr.bf16.mxu0 0
        %1173 = vmatpush1.bf16.xpose.msra.mxu0 0
        %1174 = vmatprep.subr.bf16.mxu0 0
        %1175 = vmatpush1.bf16.xpose.msra.mxu0 0
        %1176 = vmatprep.subr.bf16.mxu0 0
        %1177 = vmatpush1.bf16.xpose.msra.mxu0 0
        %1178 = vmatprep.subr.bf16.mxu0 0
        %1179 = vmatpush1.bf16.xpose.msra.mxu0 0
        %1180 = vmatprep.subr.bf16.mxu0 0
        %1181 = vmatpush1.bf16.xpose.msra.mxu0 0
        %1182 = vmatprep.subr.bf16.mxu0 0
        %1183 = vmatpush1.bf16.xpose.msra.mxu0 0
        %1184 = vmatprep.subr.bf16.mxu0 0
        %1185 = vmatpush1.bf16.xpose.msra.mxu0 0
        %1186 = vmatprep.subr.bf16.mxu0 0
        %1187 = vmatpush1.bf16.xpose.msra.mxu0 0
        %1188 = vmatprep.subr.bf16.mxu0 0
        %1189 = vmatpush1.bf16.xpose.msra.mxu0 0
        %1190 = vmatprep.subr.bf16.mxu0 0
        %1191 = vmatpush1.bf16.xpose.msra.mxu0 0
        %1192 = vmatprep.subr.bf16.mxu0 0
        %1193 = vmatpush1.bf16.xpose.msra.mxu0 0
        %1194 = vmatprep.subr.bf16.mxu0 0
        %1195 = vmatpush1.bf16.xpose.msra.mxu0 0
        %1196 = vmatprep.subr.bf16.mxu0 0
        %1197 = vmatpush1.bf16.xpose.msra.mxu0 0
        %1198 = vmatprep.subr.bf16.mxu0 0
        %1199 = vmatpush1.bf16.xpose.msra.mxu0 0
        %1200 = vmatprep.subr.bf16.mxu0 0
        %1201 = vmatpush1.bf16.xpose.msra.mxu0 0
        %1202 = vmatprep.mubr.bf16.mxu0 0
        %1203 = vmatmul.mubr.bf16.gmra.mrb[0].mxu0 %v1165
        %v1204 = vpop.f32.mrb[0].mxu0
        %v1205 = vadd.f32 %v1162, %v1204
        %v1206 = vpop.f32.mrb[0].mxu0
        %v1207 = vpop.f32.mrb[0].mxu0
        %v1208 = vpop.f32.mrb[0].mxu0
        %1209 = vdwg.mxu0
        %vm1210 = vcmask 130048
        %v1211 = vsel %vm1210, %v1205, -inf
        %1212 = vmax.xlane.f32.xlu0 %v1211
        %v1213 = vpop.xlane.xlu0 %1212
        %v1214 = vsub.f32 %v1205, %v1213
        %v1215 = vmul.f32 %v1214, 1.442695
        %v1216 = vpow.pop %v1215
        %v1217 = vsel %vm1210, %v1216, 0.0
        %1218 = vadd.xlane.f32.xlu0 %v1217
        %v1219 = vpop.xlane.xlu0 %1218
        %v1220 = vrcp.pop %v1219
        %v1221 = vmul.f32 %v1216, %v1220
        %v1222 = vpack.c.bf16 %v1221, %v1221
        %v1224 = vsel %vm1210, %v1222, 0
        %1226 = vmatprep.subr.bf16.mxu0 0
        %1227 = vmatpush1.bf16.msra.mxu0 %v1159
        %1228 = vmatprep.subr.bf16.mxu0 0
        %1229 = vmatpush1.bf16.msra.mxu0 0
        %1230 = vmatprep.subr.bf16.mxu0 0
        %1231 = vmatpush1.bf16.msra.mxu0 0
        %1232 = vmatprep.subr.bf16.mxu0 0
        %1233 = vmatpush1.bf16.msra.mxu0 0
        %1234 = vmatprep.subr.bf16.mxu0 0
        %1235 = vmatpush1.bf16.msra.mxu0 0
        %1236 = vmatprep.subr.bf16.mxu0 0
        %1237 = vmatpush1.bf16.msra.mxu0 0
        %1238 = vmatprep.subr.bf16.mxu0 0
        %1239 = vmatpush1.bf16.msra.mxu0 0
        %1240 = vmatprep.subr.bf16.mxu0 0
        %1241 = vmatpush1.bf16.msra.mxu0 0
        %1242 = vmatprep.subr.bf16.mxu0 0
        %1243 = vmatpush1.bf16.msra.mxu0 0
        %1244 = vmatprep.subr.bf16.mxu0 0
        %1245 = vmatpush1.bf16.msra.mxu0 0
        %1246 = vmatprep.subr.bf16.mxu0 0
        %1247 = vmatpush1.bf16.msra.mxu0 0
        %1248 = vmatprep.subr.bf16.mxu0 0
        %1249 = vmatpush1.bf16.msra.mxu0 0
        %1250 = vmatprep.subr.bf16.mxu0 0
        %1251 = vmatpush1.bf16.msra.mxu0 0
        %1252 = vmatprep.subr.bf16.mxu0 0
        %1253 = vmatpush1.bf16.msra.mxu0 0
        %1254 = vmatprep.subr.bf16.mxu0 0
        %1255 = vmatpush1.bf16.msra.mxu0 0
        %1256 = vmatprep.subr.bf16.mxu0 0
        %1257 = vmatpush1.bf16.msra.mxu0 0
        %1258 = vmatprep.mubr.bf16.mxu0 0
        %1259 = vmatmul.mubr.bf16.gmra.mrb[0].mxu0 %v1224
        %v1260 = vpop.f32.mrb[0].mxu0
        %v1261 = vadd.f32 0.0, %v1260
        %v1262 = vpop.f32.mrb[0].mxu0
        %v1263 = vpop.f32.mrb[0].mxu0
        %v1264 = vpop.f32.mrb[0].mxu0
        %1265 = vdwg.mxu0
        %v1266 = vpack.c.bf16 %v1261, %v1261
        %1268 = vrot.lane.b32.xlu0 %v637, 64
        %v1269 = vpop.permute.xlu0 %1268
        %1271 = vrot.lane.b32.xlu0 %v898, 64
        %v1272 = vpop.permute.xlu0 %1271
        %v1274 = vsel %vm1163, %v1269, 0
        %v1277 = vsel %vm1163, %v1272, 0
        %1279 = vmatprep.subr.bf16.mxu0 0
        %1280 = vmatpush1.bf16.xpose.msra.mxu0 %v1277
        %1281 = vmatprep.subr.bf16.mxu0 0
        %1282 = vmatpush1.bf16.xpose.msra.mxu0 0
        %1283 = vmatprep.subr.bf16.mxu0 0
        %1284 = vmatpush1.bf16.xpose.msra.mxu0 0
        %1285 = vmatprep.subr.bf16.mxu0 0
        %1286 = vmatpush1.bf16.xpose.msra.mxu0 0
        %1287 = vmatprep.subr.bf16.mxu0 0
        %1288 = vmatpush1.bf16.xpose.msra.mxu0 0
        %1289 = vmatprep.subr.bf16.mxu0 0
        %1290 = vmatpush1.bf16.xpose.msra.mxu0 0
        %1291 = vmatprep.subr.bf16.mxu0 0
        %1292 = vmatpush1.bf16.xpose.msra.mxu0 0
        %1293 = vmatprep.subr.bf16.mxu0 0
        %1294 = vmatpush1.bf16.xpose.msra.mxu0 0
        %1295 = vmatprep.subr.bf16.mxu0 0
        %1296 = vmatpush1.bf16.xpose.msra.mxu0 0
        %1297 = vmatprep.subr.bf16.mxu0 0
        %1298 = vmatpush1.bf16.xpose.msra.mxu0 0
        %1299 = vmatprep.subr.bf16.mxu0 0
        %1300 = vmatpush1.bf16.xpose.msra.mxu0 0
        %1301 = vmatprep.subr.bf16.mxu0 0
        %1302 = vmatpush1.bf16.xpose.msra.mxu0 0
        %1303 = vmatprep.subr.bf16.mxu0 0
        %1304 = vmatpush1.bf16.xpose.msra.mxu0 0
        %1305 = vmatprep.subr.bf16.mxu0 0
        %1306 = vmatpush1.bf16.xpose.msra.mxu0 0
        %1307 = vmatprep.subr.bf16.mxu0 0
        %1308 = vmatpush1.bf16.xpose.msra.mxu0 0
        %1309 = vmatprep.subr.bf16.mxu0 0
        %1310 = vmatpush1.bf16.xpose.msra.mxu0 0
        %1311 = vmatprep.mubr.bf16.mxu0 0
        %1312 = vmatmul.mubr.bf16.gmra.mrb[0].mxu0 %v1274
        %v1313 = vpop.f32.mrb[0].mxu0
        %v1314 = vadd.f32 %v1162, %v1313
        %v1315 = vpop.f32.mrb[0].mxu0
        %v1316 = vpop.f32.mrb[0].mxu0
        %v1317 = vpop.f32.mrb[0].mxu0
        %1318 = vdwg.mxu0
        %v1319 = vsel %vm1210, %v1314, -inf
        %1320 = vmax.xlane.f32.xlu0 %v1319
        %v1321 = vpop.xlane.xlu0 %1320
        %v1322 = vsub.f32 %v1314, %v1321
        %v1323 = vmul.f32 %v1322, 1.442695
        %v1324 = vpow.pop %v1323
        %v1325 = vsel %vm1210, %v1324, 0.0
        %1326 = vadd.xlane.f32.xlu0 %v1325
        %v1327 = vpop.xlane.xlu0 %1326
        %v1328 = vrcp.pop %v1327
        %v1329 = vmul.f32 %v1324, %v1328
        %v1330 = vpack.c.bf16 %v1329, %v1329
        %1332 = vrot.lane.b32.xlu0 %v1159, 64
        %v1333 = vpop.permute.xlu0 %1332
        %v1336 = vsel %vm1210, %v1330, 0
        %1338 = vmatprep.subr.bf16.mxu0 0
        %1339 = vmatpush1.bf16.msra.mxu0 %v1333
        %1340 = vmatprep.subr.bf16.mxu0 0
        %1341 = vmatpush1.bf16.msra.mxu0 0
        %1342 = vmatprep.subr.bf16.mxu0 0
        %1343 = vmatpush1.bf16.msra.mxu0 0
        %1344 = vmatprep.subr.bf16.mxu0 0
        %1345 = vmatpush1.bf16.msra.mxu0 0
        %1346 = vmatprep.subr.bf16.mxu0 0
        %1347 = vmatpush1.bf16.msra.mxu0 0
        %1348 = vmatprep.subr.bf16.mxu0 0
        %1349 = vmatpush1.bf16.msra.mxu0 0
        %1350 = vmatprep.subr.bf16.mxu0 0
        %1351 = vmatpush1.bf16.msra.mxu0 0
        %1352 = vmatprep.subr.bf16.mxu0 0
        %1353 = vmatpush1.bf16.msra.mxu0 0
        %1354 = vmatprep.subr.bf16.mxu0 0
        %1355 = vmatpush1.bf16.msra.mxu0 0
        %1356 = vmatprep.subr.bf16.mxu0 0
        %1357 = vmatpush1.bf16.msra.mxu0 0
        %1358 = vmatprep.subr.bf16.mxu0 0
        %1359 = vmatpush1.bf16.msra.mxu0 0
        %1360 = vmatprep.subr.bf16.mxu0 0
        %1361 = vmatpush1.bf16.msra.mxu0 0
        %1362 = vmatprep.subr.bf16.mxu0 0
        %1363 = vmatpush1.bf16.msra.mxu0 0
        %1364 = vmatprep.subr.bf16.mxu0 0
        %1365 = vmatpush1.bf16.msra.mxu0 0
        %1366 = vmatprep.subr.bf16.mxu0 0
        %1367 = vmatpush1.bf16.msra.mxu0 0
        %1368 = vmatprep.subr.bf16.mxu0 0
        %1369 = vmatpush1.bf16.msra.mxu0 0
        %1370 = vmatprep.mubr.bf16.mxu0 0
        %1371 = vmatmul.mubr.bf16.gmra.mrb[0].mxu0 %v1336
        %v1372 = vpop.f32.mrb[0].mxu0
        %v1373 = vadd.f32 0.0, %v1372
        %v1374 = vpop.f32.mrb[0].mxu0
        %v1375 = vpop.f32.mrb[0].mxu0
        %v1376 = vpop.f32.mrb[0].mxu0
        %1377 = vdwg.mxu0
        %v1378 = vpack.c.bf16 %v1373, %v1373
        %v1380 = vsel %vm1163, %v638, 0
        %v1383 = vsel %vm1163, %v899, 0
        %1385 = vmatprep.subr.bf16.mxu0 0
        %1386 = vmatpush1.bf16.xpose.msra.mxu0 %v1383
        %1387 = vmatprep.subr.bf16.mxu0 0
        %1388 = vmatpush1.bf16.xpose.msra.mxu0 0
        %1389 = vmatprep.subr.bf16.mxu0 0
        %1390 = vmatpush1.bf16.xpose.msra.mxu0 0
        %1391 = vmatprep.subr.bf16.mxu0 0
        %1392 = vmatpush1.bf16.xpose.msra.mxu0 0
        %1393 = vmatprep.subr.bf16.mxu0 0
        %1394 = vmatpush1.bf16.xpose.msra.mxu0 0
        %1395 = vmatprep.subr.bf16.mxu0 0
        %1396 = vmatpush1.bf16.xpose.msra.mxu0 0
        %1397 = vmatprep.subr.bf16.mxu0 0
        %1398 = vmatpush1.bf16.xpose.msra.mxu0 0
        %1399 = vmatprep.subr.bf16.mxu0 0
        %1400 = vmatpush1.bf16.xpose.msra.mxu0 0
        %1401 = vmatprep.subr.bf16.mxu0 0
        %1402 = vmatpush1.bf16.xpose.msra.mxu0 0
        %1403 = vmatprep.subr.bf16.mxu0 0
        %1404 = vmatpush1.bf16.xpose.msra.mxu0 0
        %1405 = vmatprep.subr.bf16.mxu0 0
        %1406 = vmatpush1.bf16.xpose.msra.mxu0 0
        %1407 = vmatprep.subr.bf16.mxu0 0
        %1408 = vmatpush1.bf16.xpose.msra.mxu0 0
        %1409 = vmatprep.subr.bf16.mxu0 0
        %1410 = vmatpush1.bf16.xpose.msra.mxu0 0
        %1411 = vmatprep.subr.bf16.mxu0 0
        %1412 = vmatpush1.bf16.xpose.msra.mxu0 0
        %1413 = vmatprep.subr.bf16.mxu0 0
        %1414 = vmatpush1.bf16.xpose.msra.mxu0 0
        %1415 = vmatprep.subr.bf16.mxu0 0
        %1416 = vmatpush1.bf16.xpose.msra.mxu0 0
        %1417 = vmatprep.mubr.bf16.mxu0 0
        %1418 = vmatmul.mubr.bf16.gmra.mrb[0].mxu0 %v1380
        %v1419 = vpop.f32.mrb[0].mxu0
        %v1420 = vadd.f32 %v1162, %v1419
        %v1421 = vpop.f32.mrb[0].mxu0
        %v1422 = vpop.f32.mrb[0].mxu0
        %v1423 = vpop.f32.mrb[0].mxu0
        %1424 = vdwg.mxu0
        %v1425 = vsel %vm1210, %v1420, -inf
        %1426 = vmax.xlane.f32.xlu0 %v1425
        %v1427 = vpop.xlane.xlu0 %1426
        %v1428 = vsub.f32 %v1420, %v1427
        %v1429 = vmul.f32 %v1428, 1.442695
        %v1430 = vpow.pop %v1429
        %v1431 = vsel %vm1210, %v1430, 0.0
        %1432 = vadd.xlane.f32.xlu0 %v1431
        %v1433 = vpop.xlane.xlu0 %1432
        %v1434 = vrcp.pop %v1433
        %v1435 = vmul.f32 %v1430, %v1434
        %v1436 = vpack.c.bf16 %v1435, %v1435
        %v1438 = vsel %vm1210, %v1436, 0
        %1440 = vmatprep.subr.bf16.mxu0 0
        %1441 = vmatpush1.bf16.msra.mxu0 %v1160
        %1442 = vmatprep.subr.bf16.mxu0 0
        %1443 = vmatpush1.bf16.msra.mxu0 0
        %1444 = vmatprep.subr.bf16.mxu0 0
        %1445 = vmatpush1.bf16.msra.mxu0 0
        %1446 = vmatprep.subr.bf16.mxu0 0
        %1447 = vmatpush1.bf16.msra.mxu0 0
        %1448 = vmatprep.subr.bf16.mxu0 0
        %1449 = vmatpush1.bf16.msra.mxu0 0
        %1450 = vmatprep.subr.bf16.mxu0 0
        %1451 = vmatpush1.bf16.msra.mxu0 0
        %1452 = vmatprep.subr.bf16.mxu0 0
        %1453 = vmatpush1.bf16.msra.mxu0 0
        %1454 = vmatprep.subr.bf16.mxu0 0
        %1455 = vmatpush1.bf16.msra.mxu0 0
        %1456 = vmatprep.subr.bf16.mxu0 0
        %1457 = vmatpush1.bf16.msra.mxu0 0
        %1458 = vmatprep.subr.bf16.mxu0 0
        %1459 = vmatpush1.bf16.msra.mxu0 0
        %1460 = vmatprep.subr.bf16.mxu0 0
        %1461 = vmatpush1.bf16.msra.mxu0 0
        %1462 = vmatprep.subr.bf16.mxu0 0
        %1463 = vmatpush1.bf16.msra.mxu0 0
        %1464 = vmatprep.subr.bf16.mxu0 0
        %1465 = vmatpush1.bf16.msra.mxu0 0
        %1466 = vmatprep.subr.bf16.mxu0 0
        %1467 = vmatpush1.bf16.msra.mxu0 0
        %1468 = vmatprep.subr.bf16.mxu0 0
        %1469 = vmatpush1.bf16.msra.mxu0 0
        %1470 = vmatprep.subr.bf16.mxu0 0
        %1471 = vmatpush1.bf16.msra.mxu0 0
        %1472 = vmatprep.mubr.bf16.mxu0 0
        %1473 = vmatmul.mubr.bf16.gmra.mrb[0].mxu0 %v1438
        %v1474 = vpop.f32.mrb[0].mxu0
        %v1475 = vadd.f32 0.0, %v1474
        %v1476 = vpop.f32.mrb[0].mxu0
        %v1477 = vpop.f32.mrb[0].mxu0
        %v1478 = vpop.f32.mrb[0].mxu0
        %1479 = vdwg.mxu0
        %v1480 = vpack.c.bf16 %v1475, %v1475
        %1482 = vrot.lane.b32.xlu0 %v638, 64
        %v1483 = vpop.permute.xlu0 %1482
        %1485 = vrot.lane.b32.xlu0 %v899, 64
        %v1486 = vpop.permute.xlu0 %1485
        %v1488 = vsel %vm1163, %v1483, 0
        %v1491 = vsel %vm1163, %v1486, 0
        %1493 = vmatprep.subr.bf16.mxu0 0
        %1494 = vmatpush1.bf16.xpose.msra.mxu0 %v1491
        %1495 = vmatprep.subr.bf16.mxu0 0
        %1496 = vmatpush1.bf16.xpose.msra.mxu0 0
        %1497 = vmatprep.subr.bf16.mxu0 0
        %1498 = vmatpush1.bf16.xpose.msra.mxu0 0
        %1499 = vmatprep.subr.bf16.mxu0 0
        %1500 = vmatpush1.bf16.xpose.msra.mxu0 0
        %1501 = vmatprep.subr.bf16.mxu0 0
        %1502 = vmatpush1.bf16.xpose.msra.mxu0 0
        %1503 = vmatprep.subr.bf16.mxu0 0
        %1504 = vmatpush1.bf16.xpose.msra.mxu0 0
        %1505 = vmatprep.subr.bf16.mxu0 0
        %1506 = vmatpush1.bf16.xpose.msra.mxu0 0
        %1507 = vmatprep.subr.bf16.mxu0 0
        %1508 = vmatpush1.bf16.xpose.msra.mxu0 0
        %1509 = vmatprep.subr.bf16.mxu0 0
        %1510 = vmatpush1.bf16.xpose.msra.mxu0 0
        %1511 = vmatprep.subr.bf16.mxu0 0
        %1512 = vmatpush1.bf16.xpose.msra.mxu0 0
        %1513 = vmatprep.subr.bf16.mxu0 0
        %1514 = vmatpush1.bf16.xpose.msra.mxu0 0
        %1515 = vmatprep.subr.bf16.mxu0 0
        %1516 = vmatpush1.bf16.xpose.msra.mxu0 0
        %1517 = vmatprep.subr.bf16.mxu0 0
        %1518 = vmatpush1.bf16.xpose.msra.mxu0 0
        %1519 = vmatprep.subr.bf16.mxu0 0
        %1520 = vmatpush1.bf16.xpose.msra.mxu0 0
        %1521 = vmatprep.subr.bf16.mxu0 0
        %1522 = vmatpush1.bf16.xpose.msra.mxu0 0
        %1523 = vmatprep.subr.bf16.mxu0 0
        %1524 = vmatpush1.bf16.xpose.msra.mxu0 0
        %1525 = vmatprep.mubr.bf16.mxu0 0
        %1526 = vmatmul.mubr.bf16.gmra.mrb[0].mxu0 %v1488
        %v1527 = vpop.f32.mrb[0].mxu0
        %v1528 = vadd.f32 %v1162, %v1527
        %v1529 = vpop.f32.mrb[0].mxu0
        %v1530 = vpop.f32.mrb[0].mxu0
        %v1531 = vpop.f32.mrb[0].mxu0
        %1532 = vdwg.mxu0
        %v1533 = vsel %vm1210, %v1528, -inf
        %1534 = vmax.xlane.f32.xlu0 %v1533
        %v1535 = vpop.xlane.xlu0 %1534
        %v1536 = vsub.f32 %v1528, %v1535
        %v1537 = vmul.f32 %v1536, 1.442695
        %v1538 = vpow.pop %v1537
        %v1539 = vsel %vm1210, %v1538, 0.0
        %1540 = vadd.xlane.f32.xlu0 %v1539
        %v1541 = vpop.xlane.xlu0 %1540
        %v1542 = vrcp.pop %v1541
        %v1543 = vmul.f32 %v1538, %v1542
        %v1544 = vpack.c.bf16 %v1543, %v1543
        %1546 = vrot.lane.b32.xlu0 %v1160, 64
        %v1547 = vpop.permute.xlu0 %1546
        %v1550 = vsel %vm1210, %v1544, 0
        %1552 = vmatprep.subr.bf16.mxu0 0
        %1553 = vmatpush1.bf16.msra.mxu0 %v1547
        %1554 = vmatprep.subr.bf16.mxu0 0
        %1555 = vmatpush1.bf16.msra.mxu0 0
        %1556 = vmatprep.subr.bf16.mxu0 0
        %1557 = vmatpush1.bf16.msra.mxu0 0
        %1558 = vmatprep.subr.bf16.mxu0 0
        %1559 = vmatpush1.bf16.msra.mxu0 0
        %1560 = vmatprep.subr.bf16.mxu0 0
        %1561 = vmatpush1.bf16.msra.mxu0 0
        %1562 = vmatprep.subr.bf16.mxu0 0
        %1563 = vmatpush1.bf16.msra.mxu0 0
        %1564 = vmatprep.subr.bf16.mxu0 0
        %1565 = vmatpush1.bf16.msra.mxu0 0
        %1566 = vmatprep.subr.bf16.mxu0 0
        %1567 = vmatpush1.bf16.msra.mxu0 0
        %1568 = vmatprep.subr.bf16.mxu0 0
        %1569 = vmatpush1.bf16.msra.mxu0 0
        %1570 = vmatprep.subr.bf16.mxu0 0
        %1571 = vmatpush1.bf16.msra.mxu0 0
        %1572 = vmatprep.subr.bf16.mxu0 0
        %1573 = vmatpush1.bf16.msra.mxu0 0
        %1574 = vmatprep.subr.bf16.mxu0 0
        %1575 = vmatpush1.bf16.msra.mxu0 0
        %1576 = vmatprep.subr.bf16.mxu0 0
        %1577 = vmatpush1.bf16.msra.mxu0 0
        %1578 = vmatprep.subr.bf16.mxu0 0
        %1579 = vmatpush1.bf16.msra.mxu0 0
        %1580 = vmatprep.subr.bf16.mxu0 0
        %1581 = vmatpush1.bf16.msra.mxu0 0
        %1582 = vmatprep.subr.bf16.mxu0 0
        %1583 = vmatpush1.bf16.msra.mxu0 0
        %1584 = vmatprep.mubr.bf16.mxu0 0
        %1585 = vmatmul.mubr.bf16.gmra.mrb[0].mxu0 %v1550
        %v1586 = vpop.f32.mrb[0].mxu0
        %v1587 = vadd.f32 0.0, %v1586
        %v1588 = vpop.f32.mrb[0].mxu0
        %v1589 = vpop.f32.mrb[0].mxu0
        %v1590 = vpop.f32.mrb[0].mxu0
        %1591 = vdwg.mxu0
        %v1592 = vpack.c.bf16 %v1587, %v1587
        %1594 = vrot.lane.b32.xlu0 %v1378, 64
        %v1595 = vpop.permute.xlu0 %1594
        %1597 = vrot.lane.b32.xlu0 %v1592, 64
        %v1598 = vpop.permute.xlu0 %1597
        %v1601 = vsel %vm1163, %v1266, %v1595
        %v1605 = vsel %vm1163, %v1480, %v1598
        %s1607 = scalar_lea.vmem [#allocation8], 768
        %v1608 = vld [vmem:[%s1607] sm:$0xff]
        %v1609 = vld [vmem:[%s1607 + $0x8] sm:$0xff]
        %v1610 = vld [vmem:[%s1607 + $0x10] sm:$0xff]
        %v1611 = vld [vmem:[%s1607 + $0x18] sm:$0xff]
        %v1612 = vld [vmem:[%s1607 + $0x20] sm:$0xff]
        %v1613 = vld [vmem:[%s1607 + $0x28] sm:$0xff]
        %v1614 = vld [vmem:[%s1607 + $0x30] sm:$0xff]
        %v1615 = vld [vmem:[%s1607 + $0x38] sm:$0xff]
        %v1616 = vld [vmem:[%s1607 + $0x40] sm:$0xff]
        %v1617 = vld [vmem:[%s1607 + $0x48] sm:$0xff]
        %v1618 = vld [vmem:[%s1607 + $0x50] sm:$0xff]
        %v1619 = vld [vmem:[%s1607 + $0x58] sm:$0xff]
        %v1620 = vld [vmem:[%s1607 + $0x60] sm:$0xff]
        %v1621 = vld [vmem:[%s1607 + $0x68] sm:$0xff]
        %v1622 = vld [vmem:[%s1607 + $0x70] sm:$0xff]
        %v1623 = vld [vmem:[%s1607 + $0x78] sm:$0xff]
        %v1624 = vld [vmem:[%s1607 + $0x80] sm:$0xff]
        %v1625 = vld [vmem:[%s1607 + $0x88] sm:$0xff]
        %v1626 = vld [vmem:[%s1607 + $0x90] sm:$0xff]
        %v1627 = vld [vmem:[%s1607 + $0x98] sm:$0xff]
        %v1628 = vld [vmem:[%s1607 + $0xa0] sm:$0xff]
        %v1629 = vld [vmem:[%s1607 + $0xa8] sm:$0xff]
        %v1630 = vld [vmem:[%s1607 + $0xb0] sm:$0xff]
        %v1631 = vld [vmem:[%s1607 + $0xb8] sm:$0xff]
        %v1632 = vld [vmem:[%s1607 + $0xc0] sm:$0xff]
        %v1633 = vld [vmem:[%s1607 + $0xc8] sm:$0xff]
        %v1634 = vld [vmem:[%s1607 + $0xd0] sm:$0xff]
        %v1635 = vld [vmem:[%s1607 + $0xd8] sm:$0xff]
        %v1636 = vld [vmem:[%s1607 + $0xe0] sm:$0xff]
        %v1637 = vld [vmem:[%s1607 + $0xe8] sm:$0xff]
        %v1638 = vld [vmem:[%s1607 + $0xf0] sm:$0xff]
        %v1639 = vld [vmem:[%s1607 + $0xf8] sm:$0xff]
        %s1640 = scalar_lea.vmem %s5, 3
        %v1641 = vld [vmem:[%s1640] ss:$4 sm:$0x3]
        %v1643 = vlaneseq
        %v1644 = vshrl.u32 %v1643, 7
        %v1645 = vsub.s32 0, %v1644
        %v1646 = vrot.slane %v1641, %v1645
        %v1647 = vlaneseq
        %v1648 = vshrl.u32 %v1647, 7
        %v1649 = vsub.s32 1, %v1648
        %v1650 = vrot.slane %v1641, %v1649
        %v1685 = vunpack.c.l.b16 %v1608
        %v1686 = vunpack.c.h.b16 %v1608
        %v1687 = vunpack.c.l.b16 %v1609
        %v1688 = vunpack.c.h.b16 %v1609
        %v1689 = vunpack.c.l.b16 %v1610
        %v1690 = vunpack.c.h.b16 %v1610
        %v1691 = vunpack.c.l.b16 %v1611
        %v1692 = vunpack.c.h.b16 %v1611
        %v1693 = vunpack.c.l.b16 %v1612
        %v1694 = vunpack.c.h.b16 %v1612
        %v1695 = vunpack.c.l.b16 %v1613
        %v1696 = vunpack.c.h.b16 %v1613
        %v1697 = vunpack.c.l.b16 %v1614
        %v1698 = vunpack.c.h.b16 %v1614
        %v1699 = vunpack.c.l.b16 %v1615
        %v1700 = vunpack.c.h.b16 %v1615
        %v1701 = vunpack.c.l.b16 %v1616
        %v1702 = vunpack.c.h.b16 %v1616
        %v1703 = vunpack.c.l.b16 %v1617
        %v1704 = vunpack.c.h.b16 %v1617
        %v1705 = vunpack.c.l.b16 %v1618
        %v1706 = vunpack.c.h.b16 %v1618
        %v1707 = vunpack.c.l.b16 %v1619
        %v1708 = vunpack.c.h.b16 %v1619
        %v1709 = vunpack.c.l.b16 %v1620
        %v1710 = vunpack.c.h.b16 %v1620
        %v1711 = vunpack.c.l.b16 %v1621
        %v1712 = vunpack.c.h.b16 %v1621
        %v1713 = vunpack.c.l.b16 %v1622
        %v1714 = vunpack.c.h.b16 %v1622
        %v1715 = vunpack.c.l.b16 %v1623
        %v1716 = vunpack.c.h.b16 %v1623
        %v1717 = vunpack.c.l.b16 %v1624
        %v1718 = vunpack.c.h.b16 %v1624
        %v1719 = vunpack.c.l.b16 %v1625
        %v1720 = vunpack.c.h.b16 %v1625
        %v1721 = vunpack.c.l.b16 %v1626
        %v1722 = vunpack.c.h.b16 %v1626
        %v1723 = vunpack.c.l.b16 %v1627
        %v1724 = vunpack.c.h.b16 %v1627
        %v1725 = vunpack.c.l.b16 %v1628
        %v1726 = vunpack.c.h.b16 %v1628
        %v1727 = vunpack.c.l.b16 %v1629
        %v1728 = vunpack.c.h.b16 %v1629
        %v1729 = vunpack.c.l.b16 %v1630
        %v1730 = vunpack.c.h.b16 %v1630
        %v1731 = vunpack.c.l.b16 %v1631
        %v1732 = vunpack.c.h.b16 %v1631
        %v1733 = vunpack.c.l.b16 %v1632
        %v1734 = vunpack.c.h.b16 %v1632
        %v1735 = vunpack.c.l.b16 %v1633
        %v1736 = vunpack.c.h.b16 %v1633
        %v1737 = vunpack.c.l.b16 %v1634
        %v1738 = vunpack.c.h.b16 %v1634
        %v1739 = vunpack.c.l.b16 %v1635
        %v1740 = vunpack.c.h.b16 %v1635
        %v1741 = vunpack.c.l.b16 %v1636
        %v1742 = vunpack.c.h.b16 %v1636
        %v1743 = vunpack.c.l.b16 %v1637
        %v1744 = vunpack.c.h.b16 %v1637
        %v1745 = vunpack.c.l.b16 %v1638
        %v1746 = vunpack.c.h.b16 %v1638
        %v1747 = vunpack.c.l.b16 %v1639
        %v1748 = vunpack.c.h.b16 %v1639
        %v1749 = vpack.c.b16 %v1687, %v1685
        %v1750 = vpack.c.b16 %v1688, %v1686
        %v1751 = vpack.c.b16 %v1691, %v1689
        %v1752 = vpack.c.b16 %v1692, %v1690
        %v1753 = vpack.c.b16 %v1695, %v1693
        %v1754 = vpack.c.b16 %v1696, %v1694
        %v1755 = vpack.c.b16 %v1699, %v1697
        %v1756 = vpack.c.b16 %v1700, %v1698
        %v1757 = vpack.c.b16 %v1703, %v1701
        %v1758 = vpack.c.b16 %v1704, %v1702
        %v1759 = vpack.c.b16 %v1707, %v1705
        %v1760 = vpack.c.b16 %v1708, %v1706
        %v1761 = vpack.c.b16 %v1711, %v1709
        %v1762 = vpack.c.b16 %v1712, %v1710
        %v1763 = vpack.c.b16 %v1715, %v1713
        %v1764 = vpack.c.b16 %v1716, %v1714
        %v1765 = vpack.c.b16 %v1719, %v1717
        %v1766 = vpack.c.b16 %v1720, %v1718
        %v1767 = vpack.c.b16 %v1723, %v1721
        %v1768 = vpack.c.b16 %v1724, %v1722
        %v1769 = vpack.c.b16 %v1727, %v1725
        %v1770 = vpack.c.b16 %v1728, %v1726
        %v1771 = vpack.c.b16 %v1731, %v1729
        %v1772 = vpack.c.b16 %v1732, %v1730
        %v1773 = vpack.c.b16 %v1735, %v1733
        %v1774 = vpack.c.b16 %v1736, %v1734
        %v1775 = vpack.c.b16 %v1739, %v1737
        %v1776 = vpack.c.b16 %v1740, %v1738
        %v1777 = vpack.c.b16 %v1743, %v1741
        %v1778 = vpack.c.b16 %v1744, %v1742
        %v1779 = vpack.c.b16 %v1747, %v1745
        %v1780 = vpack.c.b16 %v1748, %v1746
        %1813 = vmatprep.subr.bf16.mxu0 %v1750
        %1814 = vmatpush1.bf16.msra.mxu0 %v1749
        %1815 = vmatprep.subr.bf16.mxu0 %v1752
        %1816 = vmatpush1.bf16.msra.mxu0 %v1751
        %1817 = vmatprep.subr.bf16.mxu0 %v1754
        %1818 = vmatpush1.bf16.msra.mxu0 %v1753
        %1819 = vmatprep.subr.bf16.mxu0 %v1756
        %1820 = vmatpush1.bf16.msra.mxu0 %v1755
        %1821 = vmatprep.subr.bf16.mxu0 %v1758
        %1822 = vmatpush1.bf16.msra.mxu0 %v1757
        %1823 = vmatprep.subr.bf16.mxu0 %v1760
        %1824 = vmatpush1.bf16.msra.mxu0 %v1759
        %1825 = vmatprep.subr.bf16.mxu0 %v1762
        %1826 = vmatpush1.bf16.msra.mxu0 %v1761
        %1827 = vmatprep.subr.bf16.mxu0 %v1764
        %1828 = vmatpush1.bf16.msra.mxu0 %v1763
        %1829 = vmatprep.subr.bf16.mxu0 %v1766
        %1830 = vmatpush1.bf16.msra.mxu0 %v1765
        %1831 = vmatprep.subr.bf16.mxu0 %v1768
        %1832 = vmatpush1.bf16.msra.mxu0 %v1767
        %1833 = vmatprep.subr.bf16.mxu0 %v1770
        %1834 = vmatpush1.bf16.msra.mxu0 %v1769
        %1835 = vmatprep.subr.bf16.mxu0 %v1772
        %1836 = vmatpush1.bf16.msra.mxu0 %v1771
        %1837 = vmatprep.subr.bf16.mxu0 %v1774
        %1838 = vmatpush1.bf16.msra.mxu0 %v1773
        %1839 = vmatprep.subr.bf16.mxu0 %v1776
        %1840 = vmatpush1.bf16.msra.mxu0 %v1775
        %1841 = vmatprep.subr.bf16.mxu0 %v1778
        %1842 = vmatpush1.bf16.msra.mxu0 %v1777
        %1843 = vmatprep.subr.bf16.mxu0 %v1780
        %1844 = vmatpush1.bf16.msra.mxu0 %v1779
        %1845 = vmatprep.mubr.bf16.mxu0 %v1605
        %1846 = vmatmul.mubr.bf16.gmra.mrb[0].mxu0 %v1601
        %v1847 = vpop.f32.mrb[0].mxu0
        %v1848 = vadd.f32 %v1646, %v1847
        %v1849 = vpop.f32.mrb[0].mxu0
        %v1850 = vadd.f32 %v1650, %v1849
        %v1851 = vpop.f32.mrb[0].mxu0
        %v1852 = vpop.f32.mrb[0].mxu0
        %1853 = vdwg.mxu0
        %1854 = vst [vmem:[%s372] sm:$0xff] %v1848
        %1855 = vst [vmem:[%s372 + $0x8] sm:$0xff] %v1850
        %s1856 = sand.u32 %s181, 1
        %s1857 = scalar_lea.sflag [#allocation4], %s1856
        %s1858 = sand.u32 %s181, 1
        %s1859 = smul.addr %s1858, 16
        %s1860 = scalar_lea.vmem [#allocation10], %s1859
        // Predicated region
        $region61: #{tpu_custom_call.1} parent=43 // pred_check
          %p1861 = pneg %p191
        $region62: #{tpu_custom_call.1} parent=43 // pred_check_branch
          %1863 = sbr.rel (%p1861) target = $region64
        $region63: #{tpu_custom_call.1} parent=43 // pred_region
          %s1865 = ssub.s32 256, 256
          %1866 = vsyncadd %s1857, %s1865
          %s1867 = smul.addr %s27, 2
          %s1868 = smul.addr %s1867, 128
          %s1869 = scalar_lea.hbm %s6, %s1868
          %s1871 = sshll.u32 %s1860, 4
          %s1872 = int_to_ptr.vmem [resolvable:$true] %s1871
          %1874 = dma.vmem_to_hbm [thread:$0]  %s1872, 256, %s1869, %s1857
        $region64: #{tpu_custom_call.1} parent=43 // pred_fallthru
          _
      $region44: #{tpu_custom_call.1} parent=5 // pred_fallthru
        _
      %p1875 = scmp.le.s32.totalorder 2, %s22
      // Predicated region
      $region65: #{tpu_custom_call.1} parent=5 // pred_check
        %p1876 = pneg %p1875
      $region66: #{tpu_custom_call.1} parent=5 // pred_check_branch
        %1878 = sbr.rel (%p1876) target = $region68
      $region67: #{tpu_custom_call.1} parent=5 // pred_region
        %s1879 = ssub.s32 %s22, 2
        // Predicated region
        $region69: #{tpu_custom_call.1} parent=67 // pred_check
          %p1880 = pneg %p197
        $region70: #{tpu_custom_call.1} parent=67 // pred_check_branch
          %1882 = sbr.rel (%p1880) target = $region72
        $region71: #{tpu_custom_call.1} parent=67 // pred_region
          %s1883 = sand.u32 %s182, 1
          %s1884 = scalar_lea.sflag [#allocation4], %s1883
          %s1885 = sand.u32 %s182, 1
          %s1886 = smul.addr %s1885, 16
          %s1887 = scalar_lea.vmem [#allocation10], %s1886
          %1888 = dma.done %s1884, 256
        $region72: #{tpu_custom_call.1} parent=67 // pred_fallthru
          _
      $region68: #{tpu_custom_call.1} parent=5 // pred_fallthru
        _
    $region6: #{tpu_custom_call.1} parent=1 // loop_footer
      %s26 = sadd.s32 1, %s22
    $region7: #{tpu_custom_call.1} parent=1 // loop_footer_branch
      %21 = sbr.rel target = $region3
    $region8: #{tpu_custom_call.1} parent=1 // loop_exit
      _
    %1889 = vsyncpa [#allocation3], 1
    %s1890 = scalar_lea.sflag [#allocation3], 1
    %1891 = vsyncpa %s1890, 1
    %1892 = vsyncpa [#allocation6], 1
    %s1893 = scalar_lea.sflag [#allocation6], 1
    %1894 = vsyncpa %s1893, 1
    %1895 = vsyncpa [#allocation9], 1
    %1896 = vsyncpa [#allocation4], 1
    %s1897 = scalar_lea.sflag [#allocation4], 1
    %1898 = vsyncpa %s1897, 1

</llo_original>
